<compile_context>
chip_gen: v7x
topology: tpu7x:2x2x1
jax: 0.10.0
libtpu: 0.0.40
codegen_flags: <defaults>
</compile_context>

<pallas_src>
import jax
import jax.numpy as jnp
import numpy as np
from jax import lax
from jax.experimental import pallas as pl
from jax.experimental.pallas import tpu as pltpu

_UNROLL = 8  # cap on the recurrence unroll factor (review: don't fully unroll)


# ----------------------------------------------------------------------------
# In-kernel recurrence helper
# ----------------------------------------------------------------------------
def _chunk_recurrence(gx_scr, w_hh, h0, c0, mm_dt, n_steps, batch, hidden,
                      seq_out=None):
    """Serial LSTM recurrence over one time chunk.

    gx_scr holds the time-parallel input projection for the chunk, laid out as
    a 2-D (n_steps*batch, 4*hidden) slab; only h @ w_hh runs per step.
    Gate order is [i, f, o, g]: one sigmoid covers 3H, one tanh covers H.
    """
    def step(t, carry):
        h, c = carry
        row = pl.multiple_of(t * batch, batch)   # batch is a sublane multiple
        gates = gx_scr[pl.ds(row, batch), :] + jnp.dot(
            h.astype(mm_dt), w_hh, preferred_element_type=jnp.float32)
        sig = jax.nn.sigmoid(gates[:, : 3 * hidden])     # [i, f, o] in one pass
        g = jnp.tanh(gates[:, 3 * hidden:])
        i = sig[:, :hidden]
        f = sig[:, hidden: 2 * hidden]
        o = sig[:, 2 * hidden: 3 * hidden]
        c_new = f * c + i * g
        h_new = o * jnp.tanh(c_new)
        if seq_out is not None:
            seq_out[pl.ds(row, batch), :] = h_new.astype(seq_out.dtype)
        return (h_new, c_new)

    return lax.fori_loop(0, n_steps, step, (h0, c0),
                         unroll=min(_UNROLL, n_steps))


# ----------------------------------------------------------------------------
# Fused kernel: LSTM layer 1 -> LSTM layer 2 -> FC on last step
# ----------------------------------------------------------------------------
def _fused_lstm2_fc_kernel(x_ref, wih1_ref, whh1_ref, b1_ref,
                           wih2_ref, whh2_ref, b2_ref, fcw_ref, fcb_ref,
                           out_ref,
                           gx_scr, h1_seq, h1c, c1c, h2c, c2c):
    B, H = h1c.shape
    Tc = x_ref.shape[0] // B
    mm_dt = whh1_ref.dtype                 # matmul operand dtype (f32 or bf16)

    @pl.when(pl.program_id(0) == 0)
    def _init():
        h1c[...] = jnp.zeros_like(h1c)
        c1c[...] = jnp.zeros_like(c1c)
        h2c[...] = jnp.zeros_like(h2c)
        c2c[...] = jnp.zeros_like(c2c)

    # ---- layer 1: chunk-parallel input projection (M = Tc*B rows) ----------
    gx_scr[...] = jnp.dot(x_ref[...].astype(mm_dt), wih1_ref[...],
                          preferred_element_type=jnp.float32) + b1_ref[...]
    w_hh1 = whh1_ref[...]                                  # hoisted load
    h1, c1 = _chunk_recurrence(gx_scr, w_hh1, h1c[...], c1c[...], mm_dt,
                               Tc, B, H, seq_out=h1_seq)
    h1c[...] = h1
    c1c[...] = c1

    # ---- layer 2: consumes layer-1 chunk straight from VMEM (no HBM trip) --
    gx_scr[...] = jnp.dot(h1_seq[...].astype(mm_dt), wih2_ref[...],
                          preferred_element_type=jnp.float32) + b2_ref[...]
    w_hh2 = whh2_ref[...]
    h2, c2 = _chunk_recurrence(gx_scr, w_hh2, h2c[...], c2c[...], mm_dt,
                               Tc, B, H, seq_out=None)
    h2c[...] = h2
    c2c[...] = c2

    # ---- fused FC epilogue on the last timestep of the last chunk ----------
    @pl.when(pl.program_id(0) == pl.num_programs(0) - 1)
    def _final():
        out_ref[...] = (jnp.dot(h2.astype(mm_dt), fcw_ref[...],
                                preferred_element_type=jnp.float32)
                        + fcb_ref[...]).astype(out_ref.dtype)


# ----------------------------------------------------------------------------
# Wrapper
# ----------------------------------------------------------------------------
def _estimate_vmem_bytes(t_chunk, batch, E, H, O, mm_bytes):
    blk_in = 2 * t_chunk * batch * E * 4                 # double-buffered input
    weights = (E * 4 * H + 2 * H * 4 * H + H * O) * mm_bytes + (2 * 4 * H + O) * 4
    scratch = (t_chunk * batch * 4 * H * 4               # gx
               + t_chunk * batch * H * 4                 # layer-1 h chunk
               + 4 * batch * H * 4)                      # carries
    out_blk = 2 * batch * O * 4
    return blk_in + weights + scratch + out_blk + (2 << 20)


def lstm2_fc_fused_pallas(x2d, w_ih1, w_hh1, b1, w_ih2, w_hh2, b2, fc_w, fc_b,
                          *, batch, t_chunk):
    TB, E = x2d.shape
    T = TB // batch
    H = w_hh1.shape[0]
    O = fc_w.shape[1]
    assert T % t_chunk == 0, (T, t_chunk)
    n_chunks = T // t_chunk
    mm_bytes = jnp.dtype(w_hh1.dtype).itemsize

    # Re-derived VMEM budget (review): request what we use, capped at v7x's
    # 64 MiB per-TC VMEM. Shrink t_chunk if the estimate exceeds the cap.
    vmem_limit = int(min(max(_estimate_vmem_bytes(t_chunk, batch, E, H, O,
                                                  mm_bytes), 4 << 20), 64 << 20))

    return pl.pallas_call(
        _fused_lstm2_fc_kernel,
        out_shape=jax.ShapeDtypeStruct((batch, O), jnp.float32),
        grid_spec=pltpu.PrefetchScalarGridSpec(
            num_scalar_prefetch=0,
            grid=(n_chunks,),
            in_specs=[
                pl.BlockSpec((t_chunk * batch, E), lambda t: (t, 0)),
                pl.BlockSpec((E, 4 * H), lambda t: (0, 0)),
                pl.BlockSpec((H, 4 * H), lambda t: (0, 0)),
                pl.BlockSpec((1, 4 * H), lambda t: (0, 0)),
                pl.BlockSpec((H, 4 * H), lambda t: (0, 0)),
                pl.BlockSpec((H, 4 * H), lambda t: (0, 0)),
                pl.BlockSpec((1, 4 * H), lambda t: (0, 0)),
                pl.BlockSpec((H, O), lambda t: (0, 0)),
                pl.BlockSpec((1, O), lambda t: (0, 0)),
            ],
            out_specs=pl.BlockSpec((batch, O), lambda t: (0, 0)),
            scratch_shapes=[
                pltpu.VMEM((t_chunk * batch, 4 * H), jnp.float32),  # gx (L1 & L2)
                pltpu.VMEM((t_chunk * batch, H), jnp.float32),      # layer-1 h chunk
                pltpu.VMEM((batch, H), jnp.float32),                # h1 carry
                pltpu.VMEM((batch, H), jnp.float32),                # c1 carry
                pltpu.VMEM((batch, H), jnp.float32),                # h2 carry
                pltpu.VMEM((batch, H), jnp.float32),                # c2 carry
            ]),
        compiler_params=pltpu.CompilerParams(
            dimension_semantics=("arbitrary",),   # time chunks are sequential
            vmem_limit_bytes=vmem_limit),
    )(x2d, w_ih1, w_hh1, b1, w_ih2, w_hh2, b2, fc_w, fc_b)


# ----------------------------------------------------------------------------
# Parameter preparation (done ONCE, outside the jitted forward)
# ----------------------------------------------------------------------------
def _reorder_gates_ifog(w):
    """Reorder the 4H gate axis from PyTorch [i,f,g,o] to [i,f,o,g]."""
    H = w.shape[-1] // 4
    return jnp.concatenate(
        [w[..., : 2 * H], w[..., 3 * H: 4 * H], w[..., 2 * H: 3 * H]], axis=-1)


def prepare_params(params, matmul_dtype=jnp.float32):
    """Gate reorder + (optional) bf16 cast of MXU weight operands, once."""
    layers = []
    for layer in params["lstm"]:
        layers.append((
            _reorder_gates_ifog(layer["w_ih"]).astype(matmul_dtype),
            _reorder_gates_ifog(layer["w_hh"]).astype(matmul_dtype),
            _reorder_gates_ifog(layer["b"]).astype(jnp.float32),
        ))
    return {
        "embedding": params["embedding"],                 # stays f32
        "lstm": tuple(layers),
        "fc_w": params["fc_w"].astype(matmul_dtype),
        "fc_b": params["fc_b"].astype(jnp.float32),
    }


# ----------------------------------------------------------------------------
# Full model forward (matches LSTMModel.forward)
# ----------------------------------------------------------------------------
def _largest_chunk_divisor(T, max_chunk):
    for c in range(min(T, max_chunk), 0, -1):
        if T % c == 0:
            return c
    return 1


def lstm_model_forward(prepared, x_ids, *, t_chunk=32):
    B, T = x_ids.shape
    E = prepared["embedding"].shape[1]
    # TODO(synk): the embedding lookup is a data-dependent gather; it could be
    # fused into the kernel via PrefetchScalarGridSpec (ids as scalar prefetch)
    # + a pl.Element row-gather BlockSpec; kept as jnp.take (time-major) here.
    emb_tm = jnp.take(prepared["embedding"], x_ids.T, axis=0)      # (T, B, E)

    # Pad batch to a sublane multiple so the (T,B,E)->(T*B,E) collapse below is
    # layout-preserving and every per-step slice is sublane-aligned. Padded
    # rows never mix with real rows (LSTM is row-independent); sliced off at end.
    Bp = max(8, ((B + 7) // 8) * 8)
    if Bp != B:
        emb_tm = jnp.pad(emb_tm, ((0, 0), (0, Bp - B), (0, 0)))
    x2d = emb_tm.reshape(T * Bp, E)

    tc = _largest_chunk_divisor(T, t_chunk)
    (w_ih1, w_hh1, b1), (w_ih2, w_hh2, b2) = prepared["lstm"]
    out = lstm2_fc_fused_pallas(x2d, w_ih1, w_hh1, b1, w_ih2, w_hh2, b2,
                                prepared["fc_w"], prepared["fc_b"],
                                batch=Bp, t_chunk=tc)
    return out[:B]                                                 # (B, O)


# ----------------------------------------------------------------------------
# Pure-JAX reference (PyTorch gate layout [i,f,g,o]) — verification only
# ----------------------------------------------------------------------------
def _lstm_layer_ref(x_tm, w_ih, w_hh, b):
    T, B, _ = x_tm.shape
    H = w_hh.shape[0]

    def step(carry, x_t):
        h, c = carry
        gates = x_t @ w_ih + h @ w_hh + b
        i = jax.nn.sigmoid(gates[:, 0 * H:1 * H])
        f = jax.nn.sigmoid(gates[:, 1 * H:2 * H])
        g = jnp.tanh(gates[:, 2 * H:3 * H])
        o = jax.nn.sigmoid(gates[:, 3 * H:4 * H])
        c = f * c + i * g
        h = o * jnp.tanh(c)
        return (h, c), h

    init = (jnp.zeros((B, H), jnp.float32), jnp.zeros((B, H), jnp.float32))
    _, hs = jax.lax.scan(step, init, x_tm)
    return hs


def lstm_model_ref(params, x_ids):
    emb = jnp.take(params["embedding"], x_ids, axis=0)
    h = jnp.transpose(emb, (1, 0, 2))
    for layer in params["lstm"]:
        h = _lstm_layer_ref(h, layer["w_ih"], layer["w_hh"], layer["b"])
    return h[-1] @ params["fc_w"] + params["fc_b"]


# ----------------------------------------------------------------------------
# Deterministic parameter init (shapes match nn.Embedding / nn.LSTM / nn.Linear)
# ----------------------------------------------------------------------------
def init_params(key, vocab_size, embedding_dim, hidden_dim, output_dim):
    keys = jax.random.split(key, 12)
    scale = 1.0 / np.sqrt(hidden_dim)

    def u(k, shape):
        return jax.random.uniform(k, shape, jnp.float32, -scale, scale)

    params = {
        "embedding": jax.random.normal(keys[0], (vocab_size, embedding_dim),
                                       jnp.float32),
        "lstm": [],
        "fc_w": u(keys[1], (hidden_dim, output_dim)),
        "fc_b": u(keys[2], (1, output_dim)),
    }
    in_dims = [embedding_dim, hidden_dim]
    for l in range(2):
        kk = keys[3 + 4 * l: 3 + 4 * (l + 1)]
        params["lstm"].append({
            # stored pre-transposed, PyTorch gate order [i,f,g,o]:
            # (in, 4H) and (H, 4H); b = b_ih + b_hh
            "w_ih": u(kk[0], (in_dims[l], 4 * hidden_dim)),
            "w_hh": u(kk[1], (hidden_dim, 4 * hidden_dim)),
            "b": u(kk[2], (1, 4 * hidden_dim)) + u(kk[3], (1, 4 * hidden_dim)),
        })
    return params


if __name__ == "__main__":
    VOCAB, EMB, HID, OUT = 50, 16, 32, 8
    B, T = 2, 8

    key = jax.random.PRNGKey(0)
    pkey, xkey = jax.random.split(key)
    params = init_params(pkey, VOCAB, EMB, HID, OUT)
    x_ids = jax.random.randint(xkey, (B, T), 0, VOCAB, dtype=jnp.int32)

    ref = jax.block_until_ready(lstm_model_ref(params, x_ids))
    fwd = jax.jit(lstm_model_forward, static_argnames=("t_chunk",))

    # f32 MXU operands: tight numerical check (t_chunk=4 -> grid of 2 chunks,
    # exercises the carried-(h,c) path).
    prepared_f32 = prepare_params(params, jnp.float32)
    out_f32 = jax.block_until_ready(fwd(prepared_f32, x_ids, t_chunk=4))
    assert out_f32.shape == (B, OUT), out_f32.shape
    np.testing.assert_allclose(np.asarray(out_f32), np.asarray(ref),
                               rtol=1e-5, atol=1e-5)

    # bf16 MXU operands (v5e/v6e/v7x throughput knob); gate math / cell state
    # stay f32 inside the kernel, so only a relaxed tolerance is needed.
    prepared_bf16 = prepare_params(params, jnp.bfloat16)
    out_bf16 = jax.block_until_ready(fwd(prepared_bf16, x_ids, t_chunk=4))
    assert out_bf16.shape == (B, OUT), out_bf16.shape
    np.testing.assert_allclose(np.asarray(out_bf16), np.asarray(ref),
                               rtol=5e-2, atol=5e-2)

    print("KERNEL_OK")
</pallas_src>

<mosaic_0001>
module attributes {stable_mosaic.version = 11 : i64} {
  func.func @_fused_lstm2_fc_kernel(%arg0: i32, %arg1: memref<32x16xf32, #tpu.memory_space<vmem>>, %arg2: memref<16x128xf32, #tpu.memory_space<vmem>>, %arg3: memref<32x128xf32, #tpu.memory_space<vmem>>, %arg4: memref<1x128xf32, #tpu.memory_space<vmem>>, %arg5: memref<32x128xf32, #tpu.memory_space<vmem>>, %arg6: memref<32x128xf32, #tpu.memory_space<vmem>>, %arg7: memref<1x128xf32, #tpu.memory_space<vmem>>, %arg8: memref<32x8xf32, #tpu.memory_space<vmem>>, %arg9: memref<1x8xf32, #tpu.memory_space<vmem>>, %arg10: memref<8x8xf32, #tpu.memory_space<vmem>>, %arg11: memref<32x128xf32, #tpu.memory_space<vmem>>, %arg12: memref<32x32xf32, #tpu.memory_space<vmem>>, %arg13: memref<8x32xf32, #tpu.memory_space<vmem>>, %arg14: memref<8x32xf32, #tpu.memory_space<vmem>>, %arg15: memref<8x32xf32, #tpu.memory_space<vmem>>, %arg16: memref<8x32xf32, #tpu.memory_space<vmem>>) attributes {dimension_semantics = [#tpu.dimension_semantics<arbitrary>], iteration_bounds = array<i64: 2>, scalar_prefetch = 0 : i64, scratch_operands = 6 : i64, tpu.core_type = #tpu.core_type<tc>, window_params = [{transform_indices = @transform_0, window_bounds = array<i64: 32, 16>}, {pipeline_mode = #tpu.pipeline_mode<synchronous>, transform_indices = @transform_1, window_bounds = array<i64: 16, 128>}, {pipeline_mode = #tpu.pipeline_mode<synchronous>, transform_indices = @transform_2, window_bounds = array<i64: 32, 128>}, {pipeline_mode = #tpu.pipeline_mode<synchronous>, transform_indices = @transform_3, window_bounds = array<i64: 1, 128>}, {pipeline_mode = #tpu.pipeline_mode<synchronous>, transform_indices = @transform_4, window_bounds = array<i64: 32, 128>}, {pipeline_mode = #tpu.pipeline_mode<synchronous>, transform_indices = @transform_5, window_bounds = array<i64: 32, 128>}, {pipeline_mode = #tpu.pipeline_mode<synchronous>, transform_indices = @transform_6, window_bounds = array<i64: 1, 128>}, {pipeline_mode = #tpu.pipeline_mode<synchronous>, transform_indices = @transform_7, window_bounds = array<i64: 32, 8>}, {pipeline_mode = #tpu.pipeline_mode<synchronous>, transform_indices = @transform_8, window_bounds = array<i64: 1, 8>}, {pipeline_mode = #tpu.pipeline_mode<synchronous>, transform_indices = @transform_9, window_bounds = array<i64: 8, 8>}]} {
    %c0_i32 = arith.constant 0 : i32
    %0 = arith.cmpi eq, %arg0, %c0_i32 : i32
    %1 = arith.extui %0 : i1 to i32
    %c0_i32_0 = arith.constant 0 : i32
    %2 = arith.cmpi ne, %1, %c0_i32_0 : i32
    scf.if %2 {
      %cst_80 = arith.constant 0.000000e+00 : f32
      %214 = vector.broadcast %cst_80 : f32 to vector<8x32xf32>
      %c0_81 = arith.constant 0 : index
      %c0_82 = arith.constant 0 : index
      %215 = vector.load %arg13[%c0_81, %c0_82] : memref<8x32xf32, #tpu.memory_space<vmem>>, vector<8x32xf32>
      tpu.vector_store %arg13[%c0_81, %c0_82], %214 {strides = array<i32>} : memref<8x32xf32, #tpu.memory_space<vmem>>, vector<8x32xf32>,
      %cst_83 = arith.constant 0.000000e+00 : f32
      %216 = vector.broadcast %cst_83 : f32 to vector<8x32xf32>
      %c0_84 = arith.constant 0 : index
      %c0_85 = arith.constant 0 : index
      %217 = vector.load %arg14[%c0_84, %c0_85] : memref<8x32xf32, #tpu.memory_space<vmem>>, vector<8x32xf32>
      tpu.vector_store %arg14[%c0_84, %c0_85], %216 {strides = array<i32>} : memref<8x32xf32, #tpu.memory_space<vmem>>, vector<8x32xf32>,
      %cst_86 = arith.constant 0.000000e+00 : f32
      %218 = vector.broadcast %cst_86 : f32 to vector<8x32xf32>
      %c0_87 = arith.constant 0 : index
      %c0_88 = arith.constant 0 : index
      %219 = vector.load %arg15[%c0_87, %c0_88] : memref<8x32xf32, #tpu.memory_space<vmem>>, vector<8x32xf32>
      tpu.vector_store %arg15[%c0_87, %c0_88], %218 {strides = array<i32>} : memref<8x32xf32, #tpu.memory_space<vmem>>, vector<8x32xf32>,
      %cst_89 = arith.constant 0.000000e+00 : f32
      %220 = vector.broadcast %cst_89 : f32 to vector<8x32xf32>
      %c0_90 = arith.constant 0 : index
      %c0_91 = arith.constant 0 : index
      %221 = vector.load %arg16[%c0_90, %c0_91] : memref<8x32xf32, #tpu.memory_space<vmem>>, vector<8x32xf32>
      tpu.vector_store %arg16[%c0_90, %c0_91], %220 {strides = array<i32>} : memref<8x32xf32, #tpu.memory_space<vmem>>, vector<8x32xf32>,
    } else {
    }
    %c0 = arith.constant 0 : index
    %c0_1 = arith.constant 0 : index
    %3 = vector.load %arg1[%c0, %c0_1] : memref<32x16xf32, #tpu.memory_space<vmem>>, vector<32x16xf32>
    %c0_2 = arith.constant 0 : index
    %c0_3 = arith.constant 0 : index
    %4 = vector.load %arg2[%c0_2, %c0_3] : memref<16x128xf32, #tpu.memory_space<vmem>>, vector<16x128xf32>
    %cst = arith.constant dense<0.000000e+00> : vector<32x128xf32>
    %5 = tpu.matmul %3, %4, %cst {dimension_numbers = #tpu.dot_dimension_numbers<[1], [0], [0], [1], [0, 0, 1, 1], [], []>} : vector<32x16xf32>, vector<16x128xf32>, vector<32x128xf32> -> vector<32x128xf32>
    %c0_4 = arith.constant 0 : index
    %c0_5 = arith.constant 0 : index
    %6 = vector.load %arg4[%c0_4, %c0_5] : memref<1x128xf32, #tpu.memory_space<vmem>>, vector<1x128xf32>
    %7 = vector.broadcast %6 : vector<1x128xf32> to vector<32x128xf32>
    %8 = arith.addf %5, %7 : vector<32x128xf32>
    %c0_6 = arith.constant 0 : index
    %c0_7 = arith.constant 0 : index
    %9 = vector.load %arg11[%c0_6, %c0_7] : memref<32x128xf32, #tpu.memory_space<vmem>>, vector<32x128xf32>
    tpu.vector_store %arg11[%c0_6, %c0_7], %8 {strides = array<i32>} : memref<32x128xf32, #tpu.memory_space<vmem>>, vector<32x128xf32>,
    %c0_8 = arith.constant 0 : index
    %c0_9 = arith.constant 0 : index
    %10 = vector.load %arg3[%c0_8, %c0_9] : memref<32x128xf32, #tpu.memory_space<vmem>>, vector<32x128xf32>
    %c0_10 = arith.constant 0 : index
    %c0_11 = arith.constant 0 : index
    %11 = vector.load %arg13[%c0_10, %c0_11] : memref<8x32xf32, #tpu.memory_space<vmem>>, vector<8x32xf32>
    %c0_12 = arith.constant 0 : index
    %c0_13 = arith.constant 0 : index
    %12 = vector.load %arg14[%c0_12, %c0_13] : memref<8x32xf32, #tpu.memory_space<vmem>>, vector<8x32xf32>
    %c0_i32_14 = arith.constant 0 : i32
    %c8_i32 = arith.constant 8 : i32
    %13 = arith.muli %c0_i32_14, %c8_i32 : i32
    %14 = tpu.assume_multiple %13, 8 : i32
    %15 = arith.index_cast %14 : i32 to index
    %c0_15 = arith.constant 0 : index
    %16 = vector.load %arg11[%15, %c0_15] : memref<32x128xf32, #tpu.memory_space<vmem>>, vector<8x128xf32>
    %cst_16 = arith.constant dense<0.000000e+00> : vector<8x128xf32>
    %17 = tpu.matmul %11, %10, %cst_16 {dimension_numbers = #tpu.dot_dimension_numbers<[1], [0], [0], [1], [0, 0, 1, 1], [], []>} : vector<8x32xf32>, vector<32x128xf32>, vector<8x128xf32> -> vector<8x128xf32>
    %18 = arith.addf %16, %17 : vector<8x128xf32>
    %19 = vector.extract_strided_slice %18 {offsets = [0, 0], sizes = [8, 96], strides = [1, 1]} : vector<8x128xf32> to vector<8x96xf32>
    %20 = arith.negf %19 : vector<8x96xf32>
    %21 = math.exp %20 : vector<8x96xf32>
    %cst_17 = arith.constant 1.000000e+00 : f32
    %22 = vector.broadcast %cst_17 : f32 to vector<8x96xf32>
    %23 = arith.addf %22, %21 : vector<8x96xf32>
    %24 = arith.divf %22, %23 : vector<8x96xf32>
    %25 = vector.extract_strided_slice %18 {offsets = [0, 96], sizes = [8, 32], strides = [1, 1]} : vector<8x128xf32> to vector<8x32xf32>
    %26 = math.tanh %25 : vector<8x32xf32>
    %27 = vector.extract_strided_slice %24 {offsets = [0, 0], sizes = [8, 32], strides = [1, 1]} : vector<8x96xf32> to vector<8x32xf32>
    %28 = vector.extract_strided_slice %24 {offsets = [0, 32], sizes = [8, 32], strides = [1, 1]} : vector<8x96xf32> to vector<8x32xf32>
    %29 = vector.extract_strided_slice %24 {offsets = [0, 64], sizes = [8, 32], strides = [1, 1]} : vector<8x96xf32> to vector<8x32xf32>
    %30 = arith.mulf %28, %12 : vector<8x32xf32>
    %31 = arith.mulf %27, %26 : vector<8x32xf32>
    %32 = arith.addf %30, %31 : vector<8x32xf32>
    %33 = math.tanh %32 : vector<8x32xf32>
    %34 = arith.mulf %29, %33 : vector<8x32xf32>
    %35 = arith.index_cast %14 : i32 to index
    %c0_18 = arith.constant 0 : index
    %36 = vector.load %arg12[%35, %c0_18] : memref<32x32xf32, #tpu.memory_space<vmem>>, vector<8x32xf32>
    tpu.vector_store %arg12[%35, %c0_18], %34 {strides = array<i32>} : memref<32x32xf32, #tpu.memory_space<vmem>>, vector<8x32xf32>,
    %c1_i32 = arith.constant 1 : i32
    %c8_i32_19 = arith.constant 8 : i32
    %37 = arith.muli %c1_i32, %c8_i32_19 : i32
    %38 = tpu.assume_multiple %37, 8 : i32
    %39 = arith.index_cast %38 : i32 to index
    %c0_20 = arith.constant 0 : index
    %40 = vector.load %arg11[%39, %c0_20] : memref<32x128xf32, #tpu.memory_space<vmem>>, vector<8x128xf32>
    %cst_21 = arith.constant dense<0.000000e+00> : vector<8x128xf32>
    %41 = tpu.matmul %34, %10, %cst_21 {dimension_numbers = #tpu.dot_dimension_numbers<[1], [0], [0], [1], [0, 0, 1, 1], [], []>} : vector<8x32xf32>, vector<32x128xf32>, vector<8x128xf32> -> vector<8x128xf32>
    %42 = arith.addf %40, %41 : vector<8x128xf32>
    %43 = vector.extract_strided_slice %42 {offsets = [0, 0], sizes = [8, 96], strides = [1, 1]} : vector<8x128xf32> to vector<8x96xf32>
    %44 = arith.negf %43 : vector<8x96xf32>
    %45 = math.exp %44 : vector<8x96xf32>
    %cst_22 = arith.constant 1.000000e+00 : f32
    %46 = vector.broadcast %cst_22 : f32 to vector<8x96xf32>
    %47 = arith.addf %46, %45 : vector<8x96xf32>
    %48 = arith.divf %46, %47 : vector<8x96xf32>
    %49 = vector.extract_strided_slice %42 {offsets = [0, 96], sizes = [8, 32], strides = [1, 1]} : vector<8x128xf32> to vector<8x32xf32>
    %50 = math.tanh %49 : vector<8x32xf32>
    %51 = vector.extract_strided_slice %48 {offsets = [0, 0], sizes = [8, 32], strides = [1, 1]} : vector<8x96xf32> to vector<8x32xf32>
    %52 = vector.extract_strided_slice %48 {offsets = [0, 32], sizes = [8, 32], strides = [1, 1]} : vector<8x96xf32> to vector<8x32xf32>
    %53 = vector.extract_strided_slice %48 {offsets = [0, 64], sizes = [8, 32], strides = [1, 1]} : vector<8x96xf32> to vector<8x32xf32>
    %54 = arith.mulf %52, %32 : vector<8x32xf32>
    %55 = arith.mulf %51, %50 : vector<8x32xf32>
    %56 = arith.addf %54, %55 : vector<8x32xf32>
    %57 = math.tanh %56 : vector<8x32xf32>
    %58 = arith.mulf %53, %57 : vector<8x32xf32>
    %59 = arith.index_cast %38 : i32 to index
    %c0_23 = arith.constant 0 : index
    %60 = vector.load %arg12[%59, %c0_23] : memref<32x32xf32, #tpu.memory_space<vmem>>, vector<8x32xf32>
    tpu.vector_store %arg12[%59, %c0_23], %58 {strides = array<i32>} : memref<32x32xf32, #tpu.memory_space<vmem>>, vector<8x32xf32>,
    %c2_i32 = arith.constant 2 : i32
    %c8_i32_24 = arith.constant 8 : i32
    %61 = arith.muli %c2_i32, %c8_i32_24 : i32
    %62 = tpu.assume_multiple %61, 8 : i32
    %63 = arith.index_cast %62 : i32 to index
    %c0_25 = arith.constant 0 : index
    %64 = vector.load %arg11[%63, %c0_25] : memref<32x128xf32, #tpu.memory_space<vmem>>, vector<8x128xf32>
    %cst_26 = arith.constant dense<0.000000e+00> : vector<8x128xf32>
    %65 = tpu.matmul %58, %10, %cst_26 {dimension_numbers = #tpu.dot_dimension_numbers<[1], [0], [0], [1], [0, 0, 1, 1], [], []>} : vector<8x32xf32>, vector<32x128xf32>, vector<8x128xf32> -> vector<8x128xf32>
    %66 = arith.addf %64, %65 : vector<8x128xf32>
    %67 = vector.extract_strided_slice %66 {offsets = [0, 0], sizes = [8, 96], strides = [1, 1]} : vector<8x128xf32> to vector<8x96xf32>
    %68 = arith.negf %67 : vector<8x96xf32>
    %69 = math.exp %68 : vector<8x96xf32>
    %cst_27 = arith.constant 1.000000e+00 : f32
    %70 = vector.broadcast %cst_27 : f32 to vector<8x96xf32>
    %71 = arith.addf %70, %69 : vector<8x96xf32>
    %72 = arith.divf %70, %71 : vector<8x96xf32>
    %73 = vector.extract_strided_slice %66 {offsets = [0, 96], sizes = [8, 32], strides = [1, 1]} : vector<8x128xf32> to vector<8x32xf32>
    %74 = math.tanh %73 : vector<8x32xf32>
    %75 = vector.extract_strided_slice %72 {offsets = [0, 0], sizes = [8, 32], strides = [1, 1]} : vector<8x96xf32> to vector<8x32xf32>
    %76 = vector.extract_strided_slice %72 {offsets = [0, 32], sizes = [8, 32], strides = [1, 1]} : vector<8x96xf32> to vector<8x32xf32>
    %77 = vector.extract_strided_slice %72 {offsets = [0, 64], sizes = [8, 32], strides = [1, 1]} : vector<8x96xf32> to vector<8x32xf32>
    %78 = arith.mulf %76, %56 : vector<8x32xf32>
    %79 = arith.mulf %75, %74 : vector<8x32xf32>
    %80 = arith.addf %78, %79 : vector<8x32xf32>
    %81 = math.tanh %80 : vector<8x32xf32>
    %82 = arith.mulf %77, %81 : vector<8x32xf32>
    %83 = arith.index_cast %62 : i32 to index
    %c0_28 = arith.constant 0 : index
    %84 = vector.load %arg12[%83, %c0_28] : memref<32x32xf32, #tpu.memory_space<vmem>>, vector<8x32xf32>
    tpu.vector_store %arg12[%83, %c0_28], %82 {strides = array<i32>} : memref<32x32xf32, #tpu.memory_space<vmem>>, vector<8x32xf32>,
    %c3_i32 = arith.constant 3 : i32
    %c8_i32_29 = arith.constant 8 : i32
    %85 = arith.muli %c3_i32, %c8_i32_29 : i32
    %86 = tpu.assume_multiple %85, 8 : i32
    %87 = arith.index_cast %86 : i32 to index
    %c0_30 = arith.constant 0 : index
    %88 = vector.load %arg11[%87, %c0_30] : memref<32x128xf32, #tpu.memory_space<vmem>>, vector<8x128xf32>
    %cst_31 = arith.constant dense<0.000000e+00> : vector<8x128xf32>
    %89 = tpu.matmul %82, %10, %cst_31 {dimension_numbers = #tpu.dot_dimension_numbers<[1], [0], [0], [1], [0, 0, 1, 1], [], []>} : vector<8x32xf32>, vector<32x128xf32>, vector<8x128xf32> -> vector<8x128xf32>
    %90 = arith.addf %88, %89 : vector<8x128xf32>
    %91 = vector.extract_strided_slice %90 {offsets = [0, 0], sizes = [8, 96], strides = [1, 1]} : vector<8x128xf32> to vector<8x96xf32>
    %92 = arith.negf %91 : vector<8x96xf32>
    %93 = math.exp %92 : vector<8x96xf32>
    %cst_32 = arith.constant 1.000000e+00 : f32
    %94 = vector.broadcast %cst_32 : f32 to vector<8x96xf32>
    %95 = arith.addf %94, %93 : vector<8x96xf32>
    %96 = arith.divf %94, %95 : vector<8x96xf32>
    %97 = vector.extract_strided_slice %90 {offsets = [0, 96], sizes = [8, 32], strides = [1, 1]} : vector<8x128xf32> to vector<8x32xf32>
    %98 = math.tanh %97 : vector<8x32xf32>
    %99 = vector.extract_strided_slice %96 {offsets = [0, 0], sizes = [8, 32], strides = [1, 1]} : vector<8x96xf32> to vector<8x32xf32>
    %100 = vector.extract_strided_slice %96 {offsets = [0, 32], sizes = [8, 32], strides = [1, 1]} : vector<8x96xf32> to vector<8x32xf32>
    %101 = vector.extract_strided_slice %96 {offsets = [0, 64], sizes = [8, 32], strides = [1, 1]} : vector<8x96xf32> to vector<8x32xf32>
    %102 = arith.mulf %100, %80 : vector<8x32xf32>
    %103 = arith.mulf %99, %98 : vector<8x32xf32>
    %104 = arith.addf %102, %103 : vector<8x32xf32>
    %105 = math.tanh %104 : vector<8x32xf32>
    %106 = arith.mulf %101, %105 : vector<8x32xf32>
    %107 = arith.index_cast %86 : i32 to index
    %c0_33 = arith.constant 0 : index
    %108 = vector.load %arg12[%107, %c0_33] : memref<32x32xf32, #tpu.memory_space<vmem>>, vector<8x32xf32>
    tpu.vector_store %arg12[%107, %c0_33], %106 {strides = array<i32>} : memref<32x32xf32, #tpu.memory_space<vmem>>, vector<8x32xf32>,
    %c4_i32 = arith.constant 4 : i32
    %c0_34 = arith.constant 0 : index
    %c0_35 = arith.constant 0 : index
    %109 = vector.load %arg13[%c0_34, %c0_35] : memref<8x32xf32, #tpu.memory_space<vmem>>, vector<8x32xf32>
    tpu.vector_store %arg13[%c0_34, %c0_35], %106 {strides = array<i32>} : memref<8x32xf32, #tpu.memory_space<vmem>>, vector<8x32xf32>,
    %c0_36 = arith.constant 0 : index
    %c0_37 = arith.constant 0 : index
    %110 = vector.load %arg14[%c0_36, %c0_37] : memref<8x32xf32, #tpu.memory_space<vmem>>, vector<8x32xf32>
    tpu.vector_store %arg14[%c0_36, %c0_37], %104 {strides = array<i32>} : memref<8x32xf32, #tpu.memory_space<vmem>>, vector<8x32xf32>,
    %c0_38 = arith.constant 0 : index
    %c0_39 = arith.constant 0 : index
    %111 = vector.load %arg12[%c0_38, %c0_39] : memref<32x32xf32, #tpu.memory_space<vmem>>, vector<32x32xf32>
    %c0_40 = arith.constant 0 : index
    %c0_41 = arith.constant 0 : index
    %112 = vector.load %arg5[%c0_40, %c0_41] : memref<32x128xf32, #tpu.memory_space<vmem>>, vector<32x128xf32>
    %cst_42 = arith.constant dense<0.000000e+00> : vector<32x128xf32>
    %113 = tpu.matmul %111, %112, %cst_42 {dimension_numbers = #tpu.dot_dimension_numbers<[1], [0], [0], [1], [0, 0, 1, 1], [], []>} : vector<32x32xf32>, vector<32x128xf32>, vector<32x128xf32> -> vector<32x128xf32>
    %c0_43 = arith.constant 0 : index
    %c0_44 = arith.constant 0 : index
    %114 = vector.load %arg7[%c0_43, %c0_44] : memref<1x128xf32, #tpu.memory_space<vmem>>, vector<1x128xf32>
    %115 = vector.broadcast %114 : vector<1x128xf32> to vector<32x128xf32>
    %116 = arith.addf %113, %115 : vector<32x128xf32>
    %c0_45 = arith.constant 0 : index
    %c0_46 = arith.constant 0 : index
    %117 = vector.load %arg11[%c0_45, %c0_46] : memref<32x128xf32, #tpu.memory_space<vmem>>, vector<32x128xf32>
    tpu.vector_store %arg11[%c0_45, %c0_46], %116 {strides = array<i32>} : memref<32x128xf32, #tpu.memory_space<vmem>>, vector<32x128xf32>,
    %c0_47 = arith.constant 0 : index
    %c0_48 = arith.constant 0 : index
    %118 = vector.load %arg6[%c0_47, %c0_48] : memref<32x128xf32, #tpu.memory_space<vmem>>, vector<32x128xf32>
    %c0_49 = arith.constant 0 : index
    %c0_50 = arith.constant 0 : index
    %119 = vector.load %arg15[%c0_49, %c0_50] : memref<8x32xf32, #tpu.memory_space<vmem>>, vector<8x32xf32>
    %c0_51 = arith.constant 0 : index
    %c0_52 = arith.constant 0 : index
    %120 = vector.load %arg16[%c0_51, %c0_52] : memref<8x32xf32, #tpu.memory_space<vmem>>, vector<8x32xf32>
    %c0_i32_53 = arith.constant 0 : i32
    %c8_i32_54 = arith.constant 8 : i32
    %121 = arith.muli %c0_i32_53, %c8_i32_54 : i32
    %122 = tpu.assume_multiple %121, 8 : i32
    %123 = arith.index_cast %122 : i32 to index
    %c0_55 = arith.constant 0 : index
    %124 = vector.load %arg11[%123, %c0_55] : memref<32x128xf32, #tpu.memory_space<vmem>>, vector<8x128xf32>
    %cst_56 = arith.constant dense<0.000000e+00> : vector<8x128xf32>
    %125 = tpu.matmul %119, %118, %cst_56 {dimension_numbers = #tpu.dot_dimension_numbers<[1], [0], [0], [1], [0, 0, 1, 1], [], []>} : vector<8x32xf32>, vector<32x128xf32>, vector<8x128xf32> -> vector<8x128xf32>
    %126 = arith.addf %124, %125 : vector<8x128xf32>
    %127 = vector.extract_strided_slice %126 {offsets = [0, 0], sizes = [8, 96], strides = [1, 1]} : vector<8x128xf32> to vector<8x96xf32>
    %128 = arith.negf %127 : vector<8x96xf32>
    %129 = math.exp %128 : vector<8x96xf32>
    %cst_57 = arith.constant 1.000000e+00 : f32
    %130 = vector.broadcast %cst_57 : f32 to vector<8x96xf32>
    %131 = arith.addf %130, %129 : vector<8x96xf32>
    %132 = arith.divf %130, %131 : vector<8x96xf32>
    %133 = vector.extract_strided_slice %126 {offsets = [0, 96], sizes = [8, 32], strides = [1, 1]} : vector<8x128xf32> to vector<8x32xf32>
    %134 = math.tanh %133 : vector<8x32xf32>
    %135 = vector.extract_strided_slice %132 {offsets = [0, 0], sizes = [8, 32], strides = [1, 1]} : vector<8x96xf32> to vector<8x32xf32>
    %136 = vector.extract_strided_slice %132 {offsets = [0, 32], sizes = [8, 32], strides = [1, 1]} : vector<8x96xf32> to vector<8x32xf32>
    %137 = vector.extract_strided_slice %132 {offsets = [0, 64], sizes = [8, 32], strides = [1, 1]} : vector<8x96xf32> to vector<8x32xf32>
    %138 = arith.mulf %136, %120 : vector<8x32xf32>
    %139 = arith.mulf %135, %134 : vector<8x32xf32>
    %140 = arith.addf %138, %139 : vector<8x32xf32>
    %141 = math.tanh %140 : vector<8x32xf32>
    %142 = arith.mulf %137, %141 : vector<8x32xf32>
    %c1_i32_58 = arith.constant 1 : i32
    %c8_i32_59 = arith.constant 8 : i32
    %143 = arith.muli %c1_i32_58, %c8_i32_59 : i32
    %144 = tpu.assume_multiple %143, 8 : i32
    %145 = arith.index_cast %144 : i32 to index
    %c0_60 = arith.constant 0 : index
    %146 = vector.load %arg11[%145, %c0_60] : memref<32x128xf32, #tpu.memory_space<vmem>>, vector<8x128xf32>
    %cst_61 = arith.constant dense<0.000000e+00> : vector<8x128xf32>
    %147 = tpu.matmul %142, %118, %cst_61 {dimension_numbers = #tpu.dot_dimension_numbers<[1], [0], [0], [1], [0, 0, 1, 1], [], []>} : vector<8x32xf32>, vector<32x128xf32>, vector<8x128xf32> -> vector<8x128xf32>
    %148 = arith.addf %146, %147 : vector<8x128xf32>
    %149 = vector.extract_strided_slice %148 {offsets = [0, 0], sizes = [8, 96], strides = [1, 1]} : vector<8x128xf32> to vector<8x96xf32>
    %150 = arith.negf %149 : vector<8x96xf32>
    %151 = math.exp %150 : vector<8x96xf32>
    %cst_62 = arith.constant 1.000000e+00 : f32
    %152 = vector.broadcast %cst_62 : f32 to vector<8x96xf32>
    %153 = arith.addf %152, %151 : vector<8x96xf32>
    %154 = arith.divf %152, %153 : vector<8x96xf32>
    %155 = vector.extract_strided_slice %148 {offsets = [0, 96], sizes = [8, 32], strides = [1, 1]} : vector<8x128xf32> to vector<8x32xf32>
    %156 = math.tanh %155 : vector<8x32xf32>
    %157 = vector.extract_strided_slice %154 {offsets = [0, 0], sizes = [8, 32], strides = [1, 1]} : vector<8x96xf32> to vector<8x32xf32>
    %158 = vector.extract_strided_slice %154 {offsets = [0, 32], sizes = [8, 32], strides = [1, 1]} : vector<8x96xf32> to vector<8x32xf32>
    %159 = vector.extract_strided_slice %154 {offsets = [0, 64], sizes = [8, 32], strides = [1, 1]} : vector<8x96xf32> to vector<8x32xf32>
    %160 = arith.mulf %158, %140 : vector<8x32xf32>
    %161 = arith.mulf %157, %156 : vector<8x32xf32>
    %162 = arith.addf %160, %161 : vector<8x32xf32>
    %163 = math.tanh %162 : vector<8x32xf32>
    %164 = arith.mulf %159, %163 : vector<8x32xf32>
    %c2_i32_63 = arith.constant 2 : i32
    %c8_i32_64 = arith.constant 8 : i32
    %165 = arith.muli %c2_i32_63, %c8_i32_64 : i32
    %166 = tpu.assume_multiple %165, 8 : i32
    %167 = arith.index_cast %166 : i32 to index
    %c0_65 = arith.constant 0 : index
    %168 = vector.load %arg11[%167, %c0_65] : memref<32x128xf32, #tpu.memory_space<vmem>>, vector<8x128xf32>
    %cst_66 = arith.constant dense<0.000000e+00> : vector<8x128xf32>
    %169 = tpu.matmul %164, %118, %cst_66 {dimension_numbers = #tpu.dot_dimension_numbers<[1], [0], [0], [1], [0, 0, 1, 1], [], []>} : vector<8x32xf32>, vector<32x128xf32>, vector<8x128xf32> -> vector<8x128xf32>
    %170 = arith.addf %168, %169 : vector<8x128xf32>
    %171 = vector.extract_strided_slice %170 {offsets = [0, 0], sizes = [8, 96], strides = [1, 1]} : vector<8x128xf32> to vector<8x96xf32>
    %172 = arith.negf %171 : vector<8x96xf32>
    %173 = math.exp %172 : vector<8x96xf32>
    %cst_67 = arith.constant 1.000000e+00 : f32
    %174 = vector.broadcast %cst_67 : f32 to vector<8x96xf32>
    %175 = arith.addf %174, %173 : vector<8x96xf32>
    %176 = arith.divf %174, %175 : vector<8x96xf32>
    %177 = vector.extract_strided_slice %170 {offsets = [0, 96], sizes = [8, 32], strides = [1, 1]} : vector<8x128xf32> to vector<8x32xf32>
    %178 = math.tanh %177 : vector<8x32xf32>
    %179 = vector.extract_strided_slice %176 {offsets = [0, 0], sizes = [8, 32], strides = [1, 1]} : vector<8x96xf32> to vector<8x32xf32>
    %180 = vector.extract_strided_slice %176 {offsets = [0, 32], sizes = [8, 32], strides = [1, 1]} : vector<8x96xf32> to vector<8x32xf32>
    %181 = vector.extract_strided_slice %176 {offsets = [0, 64], sizes = [8, 32], strides = [1, 1]} : vector<8x96xf32> to vector<8x32xf32>
    %182 = arith.mulf %180, %162 : vector<8x32xf32>
    %183 = arith.mulf %179, %178 : vector<8x32xf32>
    %184 = arith.addf %182, %183 : vector<8x32xf32>
    %185 = math.tanh %184 : vector<8x32xf32>
    %186 = arith.mulf %181, %185 : vector<8x32xf32>
    %c3_i32_68 = arith.constant 3 : i32
    %c8_i32_69 = arith.constant 8 : i32
    %187 = arith.muli %c3_i32_68, %c8_i32_69 : i32
    %188 = tpu.assume_multiple %187, 8 : i32
    %189 = arith.index_cast %188 : i32 to index
    %c0_70 = arith.constant 0 : index
    %190 = vector.load %arg11[%189, %c0_70] : memref<32x128xf32, #tpu.memory_space<vmem>>, vector<8x128xf32>
    %cst_71 = arith.constant dense<0.000000e+00> : vector<8x128xf32>
    %191 = tpu.matmul %186, %118, %cst_71 {dimension_numbers = #tpu.dot_dimension_numbers<[1], [0], [0], [1], [0, 0, 1, 1], [], []>} : vector<8x32xf32>, vector<32x128xf32>, vector<8x128xf32> -> vector<8x128xf32>
    %192 = arith.addf %190, %191 : vector<8x128xf32>
    %193 = vector.extract_strided_slice %192 {offsets = [0, 0], sizes = [8, 96], strides = [1, 1]} : vector<8x128xf32> to vector<8x96xf32>
    %194 = arith.negf %193 : vector<8x96xf32>
    %195 = math.exp %194 : vector<8x96xf32>
    %cst_72 = arith.constant 1.000000e+00 : f32
    %196 = vector.broadcast %cst_72 : f32 to vector<8x96xf32>
    %197 = arith.addf %196, %195 : vector<8x96xf32>
    %198 = arith.divf %196, %197 : vector<8x96xf32>
    %199 = vector.extract_strided_slice %192 {offsets = [0, 96], sizes = [8, 32], strides = [1, 1]} : vector<8x128xf32> to vector<8x32xf32>
    %200 = math.tanh %199 : vector<8x32xf32>
    %201 = vector.extract_strided_slice %198 {offsets = [0, 0], sizes = [8, 32], strides = [1, 1]} : vector<8x96xf32> to vector<8x32xf32>
    %202 = vector.extract_strided_slice %198 {offsets = [0, 32], sizes = [8, 32], strides = [1, 1]} : vector<8x96xf32> to vector<8x32xf32>
    %203 = vector.extract_strided_slice %198 {offsets = [0, 64], sizes = [8, 32], strides = [1, 1]} : vector<8x96xf32> to vector<8x32xf32>
    %204 = arith.mulf %202, %184 : vector<8x32xf32>
    %205 = arith.mulf %201, %200 : vector<8x32xf32>
    %206 = arith.addf %204, %205 : vector<8x32xf32>
    %207 = math.tanh %206 : vector<8x32xf32>
    %208 = arith.mulf %203, %207 : vector<8x32xf32>
    %c4_i32_73 = arith.constant 4 : i32
    %c0_74 = arith.constant 0 : index
    %c0_75 = arith.constant 0 : index
    %209 = vector.load %arg15[%c0_74, %c0_75] : memref<8x32xf32, #tpu.memory_space<vmem>>, vector<8x32xf32>
    tpu.vector_store %arg15[%c0_74, %c0_75], %208 {strides = array<i32>} : memref<8x32xf32, #tpu.memory_space<vmem>>, vector<8x32xf32>,
    %c0_76 = arith.constant 0 : index
    %c0_77 = arith.constant 0 : index
    %210 = vector.load %arg16[%c0_76, %c0_77] : memref<8x32xf32, #tpu.memory_space<vmem>>, vector<8x32xf32>
    tpu.vector_store %arg16[%c0_76, %c0_77], %206 {strides = array<i32>} : memref<8x32xf32, #tpu.memory_space<vmem>>, vector<8x32xf32>,
    %c1_i32_78 = arith.constant 1 : i32
    %211 = arith.cmpi eq, %arg0, %c1_i32_78 : i32
    %212 = arith.extui %211 : i1 to i32
    %c0_i32_79 = arith.constant 0 : i32
    %213 = arith.cmpi ne, %212, %c0_i32_79 : i32
    scf.if %213 {
      %c0_80 = arith.constant 0 : index
      %c0_81 = arith.constant 0 : index
      %214 = vector.load %arg8[%c0_80, %c0_81] : memref<32x8xf32, #tpu.memory_space<vmem>>, vector<32x8xf32>
      %cst_82 = arith.constant dense<0.000000e+00> : vector<8x8xf32>
      %215 = tpu.matmul %208, %214, %cst_82 {dimension_numbers = #tpu.dot_dimension_numbers<[1], [0], [0], [1], [0, 0, 1, 1], [], []>} : vector<8x32xf32>, vector<32x8xf32>, vector<8x8xf32> -> vector<8x8xf32>
      %c0_83 = arith.constant 0 : index
      %c0_84 = arith.constant 0 : index
      %216 = vector.load %arg9[%c0_83, %c0_84] : memref<1x8xf32, #tpu.memory_space<vmem>>, vector<1x8xf32>
      %217 = vector.broadcast %216 : vector<1x8xf32> to vector<8x8xf32>
      %218 = arith.addf %215, %217 : vector<8x8xf32>
      %c0_85 = arith.constant 0 : index
      %c0_86 = arith.constant 0 : index
      %219 = vector.load %arg10[%c0_85, %c0_86] : memref<8x8xf32, #tpu.memory_space<vmem>>, vector<8x8xf32>
      tpu.vector_store %arg10[%c0_85, %c0_86], %218 {strides = array<i32>} : memref<8x8xf32, #tpu.memory_space<vmem>>, vector<8x8xf32>,
    } else {
    }
    return
  }
  func.func @transform_0(%arg0: i32) -> (i32, i32) {
    %c0_i32 = arith.constant 0 : i32
    %c0_i32_0 = arith.constant 0 : i32
    return %arg0, %c0_i32 : i32, i32
  }
  func.func @transform_1(%arg0: i32) -> (i32, i32) {
    %c0_i32 = arith.constant 0 : i32
    %c0_i32_0 = arith.constant 0 : i32
    %c0_i32_1 = arith.constant 0 : i32
    return %c0_i32, %c0_i32_0 : i32, i32
  }
  func.func @transform_2(%arg0: i32) -> (i32, i32) {
    %c0_i32 = arith.constant 0 : i32
    %c0_i32_0 = arith.constant 0 : i32
    %c0_i32_1 = arith.constant 0 : i32
    return %c0_i32, %c0_i32_0 : i32, i32
  }
  func.func @transform_3(%arg0: i32) -> (i32, i32) {
    %c0_i32 = arith.constant 0 : i32
    %c0_i32_0 = arith.constant 0 : i32
    %c0_i32_1 = arith.constant 0 : i32
    return %c0_i32, %c0_i32_0 : i32, i32
  }
  func.func @transform_4(%arg0: i32) -> (i32, i32) {
    %c0_i32 = arith.constant 0 : i32
    %c0_i32_0 = arith.constant 0 : i32
    %c0_i32_1 = arith.constant 0 : i32
    return %c0_i32, %c0_i32_0 : i32, i32
  }
  func.func @transform_5(%arg0: i32) -> (i32, i32) {
    %c0_i32 = arith.constant 0 : i32
    %c0_i32_0 = arith.constant 0 : i32
    %c0_i32_1 = arith.constant 0 : i32
    return %c0_i32, %c0_i32_0 : i32, i32
  }
  func.func @transform_6(%arg0: i32) -> (i32, i32) {
    %c0_i32 = arith.constant 0 : i32
    %c0_i32_0 = arith.constant 0 : i32
    %c0_i32_1 = arith.constant 0 : i32
    return %c0_i32, %c0_i32_0 : i32, i32
  }
  func.func @transform_7(%arg0: i32) -> (i32, i32) {
    %c0_i32 = arith.constant 0 : i32
    %c0_i32_0 = arith.constant 0 : i32
    %c0_i32_1 = arith.constant 0 : i32
    return %c0_i32, %c0_i32_0 : i32, i32
  }
  func.func @transform_8(%arg0: i32) -> (i32, i32) {
    %c0_i32 = arith.constant 0 : i32
    %c0_i32_0 = arith.constant 0 : i32
    %c0_i32_1 = arith.constant 0 : i32
    return %c0_i32, %c0_i32_0 : i32, i32
  }
  func.func @transform_9(%arg0: i32) -> (i32, i32) {
    %c0_i32 = arith.constant 0 : i32
    %c0_i32_0 = arith.constant 0 : i32
    %c0_i32_1 = arith.constant 0 : i32
    return %c0_i32, %c0_i32_0 : i32, i32
  }
}

</mosaic_0001>

<llo_original>
// kernel: lstm_model_forward.1
$region0: #{lstm_model_forward.1}
  #allocation0 [shape = 'u32[]', space=smem, size = 0x4, offset = 0x4, fixed_abs, tag = 'smem constant byte address 0x4 - core index']
  #allocation1 [shape = 'u32[144,128]{1,0:T(1,128)}', space=vmem, size = 0x12000, scoped, tag = 'internal scratch']
  #allocation2 [shape = 'f32[32,128]{1,0:T(8,128)}', space=vmem, size = 0x4000, scoped, tag = 'scratch operand']
  #allocation3 [shape = 'f32[32,32]{1,0:T(8,128)}', space=vmem, size = 0x4000, scoped, tag = 'scratch operand']
  #allocation4 [shape = 'f32[8,32]{1,0:T(8,128)}', space=vmem, size = 0x1000, scoped, tag = 'scratch operand']
  #allocation5 [shape = 'f32[8,32]{1,0:T(8,128)}', space=vmem, size = 0x1000, scoped, tag = 'scratch operand']
  #allocation6 [shape = 'f32[8,32]{1,0:T(8,128)}', space=vmem, size = 0x1000, scoped, tag = 'scratch operand']
  #allocation7 [shape = 'f32[8,32]{1,0:T(8,128)}', space=vmem, size = 0x1000, scoped, tag = 'scratch operand']
  %s0 = inlined_call_operand.vmem [shape: f32[64,16], index: 0, kind: input, shape index: {}]
  %s1 = inlined_call_operand.vmem [shape: f32[16,128], index: 1, kind: input, shape index: {}]
  %s2 = inlined_call_operand.vmem [shape: f32[32,128], index: 2, kind: input, shape index: {}]
  %s3 = inlined_call_operand.vmem [shape: f32[1,128], index: 3, kind: input, shape index: {}]
  %s4 = inlined_call_operand.vmem [shape: f32[32,128], index: 4, kind: input, shape index: {}]
  %s5 = inlined_call_operand.vmem [shape: f32[32,128], index: 5, kind: input, shape index: {}]
  %s6 = inlined_call_operand.vmem [shape: f32[1,128], index: 6, kind: input, shape index: {}]
  %s7 = inlined_call_operand.vmem [shape: f32[32,8], index: 7, kind: input, shape index: {}]
  %s8 = inlined_call_operand.vmem [shape: f32[1,8], index: 8, kind: input, shape index: {}]
  %s9 = inlined_call_operand.vmem [shape: f32[8,8], index: 9, kind: output, shape index: {}]
  %s10 = sld [smem:[#allocation0]]
  $region77: #{lstm_model_forward.1} parent=0
    _
  %s12 = ssub.s32 1, %s10
  %s13 = scalar_select 0, %s12, %s10
  loop: start=0, step=1, limit=4
  $region2: #{lstm_model_forward.1} parent=0 // loop_pre_header
    _
  $region3: #{lstm_model_forward.1} parent=0 // loop_header
    %s15 = sphi 0, %s19
    %p16 = scmp.ge.s32.totalorder %s15, 4
    %s25 = sphi 0, %s27
    %s28 = sphi 0, %s25
    %s29 = sphi 0, %s28
    %s45 = sphi 0, %s29
    %s49 = sphi 0, %s49
    %s51 = sphi 0, %s49
    %s52 = sphi 0, %s51
    %s66 = sphi 0, %s52
    %s70 = sphi 0, %s70
    %s72 = sphi 0, %s70
    %s73 = sphi 0, %s72
    %s87 = sphi 0, %s73
    %s91 = sphi 0, %s91
    %s93 = sphi 0, %s91
    %s94 = sphi 0, %s93
    %s108 = sphi 0, %s94
    %s112 = sphi 0, %s112
    %s114 = sphi 0, %s112
    %s115 = sphi 0, %s114
    %s129 = sphi 0, %s115
    %s133 = sphi 0, %s133
    %s135 = sphi 0, %s133
    %s136 = sphi 0, %s135
    %s150 = sphi 0, %s136
    %s154 = sphi 0, %s154
    %s156 = sphi 0, %s154
    %s157 = sphi 0, %s156
    %s171 = sphi 0, %s157
    %s175 = sphi 0, %s175
    %s177 = sphi 0, %s175
    %s178 = sphi 0, %s177
    %s192 = sphi 0, %s178
    %s196 = sphi 0, %s196
    %s198 = sphi 0, %s196
    %s199 = sphi 0, %s198
    %s213 = sphi 0, %s199
    %s217 = sphi 0, %s217
    %s219 = sphi 0, %s217
    %s220 = sphi 0, %s219
    %s234 = sphi 0, %s220
  $region4: #{lstm_model_forward.1} parent=0 // loop_header_branch
    %18 = sbr.rel (%p16) target = $region8
  $region5: #{lstm_model_forward.1} parent=0 // loop_body
    %s20 = ssub.s32 %s15, 1
    %s21 = ssub.s32 %s15, 2
    %s22 = sadd.s32 %s15, 1
    %s23 = ssub.s32 %s15, %s22
    %p24 = scmp.eq.s32.totalorder %s23, 0
    %s26 = sadd.s32 %s25, 1
    %s27 = scalar_select %p24, %s25, %s26
    %p30 = pneg %p24
    %p31 = scmp.eq.s32.totalorder %s15, 1
    %p32 = por %p30, %p31
    %p33 = scmp.ne.s32.totalorder %s25, %s28
    %p34 = scmp.eq.s32.totalorder %s15, 0
    %p35 = por %p33, %p34
    %p36 = scmp.ne.s32.totalorder %s25, %s28
    %p37 = scmp.eq.s32.totalorder %s20, 1
    %p38 = por %p36, %p37
    %p39 = scmp.ne.s32.totalorder %s28, %s29
    %p40 = scmp.eq.s32.totalorder %s20, 0
    %p41 = por %p39, %p40
    %p42 = scmp.ne.s32.totalorder %s28, %s29
    %p43 = scmp.eq.s32.totalorder %s21, 1
    %p44 = por %p42, %p43
    %p46 = scmp.ne.s32.totalorder %s29, %s45
    %p47 = scmp.eq.s32.totalorder %s21, 0
    %p48 = por %p46, %p47
    %s50 = sadd.s32 %s49, 1
    %p53 = scmp.eq.s32.totalorder %s15, 1
    %p54 = scmp.ne.s32.totalorder %s49, %s51
    %p55 = scmp.eq.s32.totalorder %s15, 0
    %p56 = por %p54, %p55
    %p57 = scmp.ne.s32.totalorder %s49, %s51
    %p58 = scmp.eq.s32.totalorder %s20, 1
    %p59 = por %p57, %p58
    %p60 = scmp.ne.s32.totalorder %s51, %s52
    %p61 = scmp.eq.s32.totalorder %s20, 0
    %p62 = por %p60, %p61
    %p63 = scmp.ne.s32.totalorder %s51, %s52
    %p64 = scmp.eq.s32.totalorder %s21, 1
    %p65 = por %p63, %p64
    %p67 = scmp.ne.s32.totalorder %s52, %s66
    %p68 = scmp.eq.s32.totalorder %s21, 0
    %p69 = por %p67, %p68
    %s71 = sadd.s32 %s70, 1
    %p74 = scmp.eq.s32.totalorder %s15, 1
    %p75 = scmp.ne.s32.totalorder %s70, %s72
    %p76 = scmp.eq.s32.totalorder %s15, 0
    %p77 = por %p75, %p76
    %p78 = scmp.ne.s32.totalorder %s70, %s72
    %p79 = scmp.eq.s32.totalorder %s20, 1
    %p80 = por %p78, %p79
    %p81 = scmp.ne.s32.totalorder %s72, %s73
    %p82 = scmp.eq.s32.totalorder %s20, 0
    %p83 = por %p81, %p82
    %p84 = scmp.ne.s32.totalorder %s72, %s73
    %p85 = scmp.eq.s32.totalorder %s21, 1
    %p86 = por %p84, %p85
    %p88 = scmp.ne.s32.totalorder %s73, %s87
    %p89 = scmp.eq.s32.totalorder %s21, 0
    %p90 = por %p88, %p89
    %s92 = sadd.s32 %s91, 1
    %p95 = scmp.eq.s32.totalorder %s15, 1
    %p96 = scmp.ne.s32.totalorder %s91, %s93
    %p97 = scmp.eq.s32.totalorder %s15, 0
    %p98 = por %p96, %p97
    %p99 = scmp.ne.s32.totalorder %s91, %s93
    %p100 = scmp.eq.s32.totalorder %s20, 1
    %p101 = por %p99, %p100
    %p102 = scmp.ne.s32.totalorder %s93, %s94
    %p103 = scmp.eq.s32.totalorder %s20, 0
    %p104 = por %p102, %p103
    %p105 = scmp.ne.s32.totalorder %s93, %s94
    %p106 = scmp.eq.s32.totalorder %s21, 1
    %p107 = por %p105, %p106
    %p109 = scmp.ne.s32.totalorder %s94, %s108
    %p110 = scmp.eq.s32.totalorder %s21, 0
    %p111 = por %p109, %p110
    %s113 = sadd.s32 %s112, 1
    %p116 = scmp.eq.s32.totalorder %s15, 1
    %p117 = scmp.ne.s32.totalorder %s112, %s114
    %p118 = scmp.eq.s32.totalorder %s15, 0
    %p119 = por %p117, %p118
    %p120 = scmp.ne.s32.totalorder %s112, %s114
    %p121 = scmp.eq.s32.totalorder %s20, 1
    %p122 = por %p120, %p121
    %p123 = scmp.ne.s32.totalorder %s114, %s115
    %p124 = scmp.eq.s32.totalorder %s20, 0
    %p125 = por %p123, %p124
    %p126 = scmp.ne.s32.totalorder %s114, %s115
    %p127 = scmp.eq.s32.totalorder %s21, 1
    %p128 = por %p126, %p127
    %p130 = scmp.ne.s32.totalorder %s115, %s129
    %p131 = scmp.eq.s32.totalorder %s21, 0
    %p132 = por %p130, %p131
    %s134 = sadd.s32 %s133, 1
    %p137 = scmp.eq.s32.totalorder %s15, 1
    %p138 = scmp.ne.s32.totalorder %s133, %s135
    %p139 = scmp.eq.s32.totalorder %s15, 0
    %p140 = por %p138, %p139
    %p141 = scmp.ne.s32.totalorder %s133, %s135
    %p142 = scmp.eq.s32.totalorder %s20, 1
    %p143 = por %p141, %p142
    %p144 = scmp.ne.s32.totalorder %s135, %s136
    %p145 = scmp.eq.s32.totalorder %s20, 0
    %p146 = por %p144, %p145
    %p147 = scmp.ne.s32.totalorder %s135, %s136
    %p148 = scmp.eq.s32.totalorder %s21, 1
    %p149 = por %p147, %p148
    %p151 = scmp.ne.s32.totalorder %s136, %s150
    %p152 = scmp.eq.s32.totalorder %s21, 0
    %p153 = por %p151, %p152
    %s155 = sadd.s32 %s154, 1
    %p158 = scmp.eq.s32.totalorder %s15, 1
    %p159 = scmp.ne.s32.totalorder %s154, %s156
    %p160 = scmp.eq.s32.totalorder %s15, 0
    %p161 = por %p159, %p160
    %p162 = scmp.ne.s32.totalorder %s154, %s156
    %p163 = scmp.eq.s32.totalorder %s20, 1
    %p164 = por %p162, %p163
    %p165 = scmp.ne.s32.totalorder %s156, %s157
    %p166 = scmp.eq.s32.totalorder %s20, 0
    %p167 = por %p165, %p166
    %p168 = scmp.ne.s32.totalorder %s156, %s157
    %p169 = scmp.eq.s32.totalorder %s21, 1
    %p170 = por %p168, %p169
    %p172 = scmp.ne.s32.totalorder %s157, %s171
    %p173 = scmp.eq.s32.totalorder %s21, 0
    %p174 = por %p172, %p173
    %s176 = sadd.s32 %s175, 1
    %p179 = scmp.eq.s32.totalorder %s15, 1
    %p180 = scmp.ne.s32.totalorder %s175, %s177
    %p181 = scmp.eq.s32.totalorder %s15, 0
    %p182 = por %p180, %p181
    %p183 = scmp.ne.s32.totalorder %s175, %s177
    %p184 = scmp.eq.s32.totalorder %s20, 1
    %p185 = por %p183, %p184
    %p186 = scmp.ne.s32.totalorder %s177, %s178
    %p187 = scmp.eq.s32.totalorder %s20, 0
    %p188 = por %p186, %p187
    %p189 = scmp.ne.s32.totalorder %s177, %s178
    %p190 = scmp.eq.s32.totalorder %s21, 1
    %p191 = por %p189, %p190
    %p193 = scmp.ne.s32.totalorder %s178, %s192
    %p194 = scmp.eq.s32.totalorder %s21, 0
    %p195 = por %p193, %p194
    %s197 = sadd.s32 %s196, 1
    %p200 = scmp.eq.s32.totalorder %s15, 1
    %p201 = scmp.ne.s32.totalorder %s196, %s198
    %p202 = scmp.eq.s32.totalorder %s15, 0
    %p203 = por %p201, %p202
    %p204 = scmp.ne.s32.totalorder %s196, %s198
    %p205 = scmp.eq.s32.totalorder %s20, 1
    %p206 = por %p204, %p205
    %p207 = scmp.ne.s32.totalorder %s198, %s199
    %p208 = scmp.eq.s32.totalorder %s20, 0
    %p209 = por %p207, %p208
    %p210 = scmp.ne.s32.totalorder %s198, %s199
    %p211 = scmp.eq.s32.totalorder %s21, 1
    %p212 = por %p210, %p211
    %p214 = scmp.ne.s32.totalorder %s199, %s213
    %p215 = scmp.eq.s32.totalorder %s21, 0
    %p216 = por %p214, %p215
    %s218 = sadd.s32 %s217, 1
    %p221 = scmp.eq.s32.totalorder %s15, 1
    %p222 = scmp.ne.s32.totalorder %s217, %s219
    %p223 = scmp.eq.s32.totalorder %s15, 0
    %p224 = por %p222, %p223
    %p225 = scmp.ne.s32.totalorder %s217, %s219
    %p226 = scmp.eq.s32.totalorder %s20, 1
    %p227 = por %p225, %p226
    %p228 = scmp.ne.s32.totalorder %s219, %s220
    %p229 = scmp.eq.s32.totalorder %s20, 0
    %p230 = por %p228, %p229
    %p231 = scmp.ne.s32.totalorder %s219, %s220
    %p232 = scmp.eq.s32.totalorder %s21, 1
    %p233 = por %p231, %p232
    %p235 = scmp.ne.s32.totalorder %s220, %s234
    %p236 = scmp.eq.s32.totalorder %s21, 0
    %p237 = por %p235, %p236
    %p238 = scmp.le.s32.totalorder 1, %s15
    %p239 = scmp.lt.s32.totalorder %s15, 3
    %p240 = pnand %p238, %p239
    %p241 = pneg %p240
    // Predicated region
    $region9: #{lstm_model_forward.1} parent=5 // pred_check
      _
    $region10: #{lstm_model_forward.1} parent=5 // pred_check_branch
      %243 = sbr.rel (%p240) target = $region12
    $region11: #{lstm_model_forward.1} parent=5 // pred_region
      %s244 = ssub.s32 %s15, 1
      // Predicated region
      $region13: #{lstm_model_forward.1} parent=11 // pred_check
        %p245 = pneg %p62
      $region14: #{lstm_model_forward.1} parent=11 // pred_check_branch
        %247 = sbr.rel (%p245) target = $region16
      $region15: #{lstm_model_forward.1} parent=11 // pred_region
        _
      $region16: #{lstm_model_forward.1} parent=11 // pred_fallthru
        _
      // Predicated region
      $region17: #{lstm_model_forward.1} parent=11 // pred_check
        %p248 = pneg %p83
      $region18: #{lstm_model_forward.1} parent=11 // pred_check_branch
        %250 = sbr.rel (%p248) target = $region20
      $region19: #{lstm_model_forward.1} parent=11 // pred_region
        _
      $region20: #{lstm_model_forward.1} parent=11 // pred_fallthru
        _
      // Predicated region
      $region21: #{lstm_model_forward.1} parent=11 // pred_check
        %p251 = pneg %p104
      $region22: #{lstm_model_forward.1} parent=11 // pred_check_branch
        %253 = sbr.rel (%p251) target = $region24
      $region23: #{lstm_model_forward.1} parent=11 // pred_region
        _
      $region24: #{lstm_model_forward.1} parent=11 // pred_fallthru
        _
      // Predicated region
      $region25: #{lstm_model_forward.1} parent=11 // pred_check
        %p254 = pneg %p125
      $region26: #{lstm_model_forward.1} parent=11 // pred_check_branch
        %256 = sbr.rel (%p254) target = $region28
      $region27: #{lstm_model_forward.1} parent=11 // pred_region
        _
      $region28: #{lstm_model_forward.1} parent=11 // pred_fallthru
        _
      // Predicated region
      $region29: #{lstm_model_forward.1} parent=11 // pred_check
        %p257 = pneg %p146
      $region30: #{lstm_model_forward.1} parent=11 // pred_check_branch
        %259 = sbr.rel (%p257) target = $region32
      $region31: #{lstm_model_forward.1} parent=11 // pred_region
        _
      $region32: #{lstm_model_forward.1} parent=11 // pred_fallthru
        _
      // Predicated region
      $region33: #{lstm_model_forward.1} parent=11 // pred_check
        %p260 = pneg %p167
      $region34: #{lstm_model_forward.1} parent=11 // pred_check_branch
        %262 = sbr.rel (%p260) target = $region36
      $region35: #{lstm_model_forward.1} parent=11 // pred_region
        _
      $region36: #{lstm_model_forward.1} parent=11 // pred_fallthru
        _
      // Predicated region
      $region37: #{lstm_model_forward.1} parent=11 // pred_check
        %p263 = pneg %p188
      $region38: #{lstm_model_forward.1} parent=11 // pred_check_branch
        %265 = sbr.rel (%p263) target = $region40
      $region39: #{lstm_model_forward.1} parent=11 // pred_region
        _
      $region40: #{lstm_model_forward.1} parent=11 // pred_fallthru
        _
      // Predicated region
      $region41: #{lstm_model_forward.1} parent=11 // pred_check
        %p266 = pneg %p209
      $region42: #{lstm_model_forward.1} parent=11 // pred_check_branch
        %268 = sbr.rel (%p266) target = $region44
      $region43: #{lstm_model_forward.1} parent=11 // pred_region
        _
      $region44: #{lstm_model_forward.1} parent=11 // pred_fallthru
        _
    $region12: #{lstm_model_forward.1} parent=5 // pred_fallthru
      _
    %p269 = scmp.lt.s32.totalorder %s15, 2
    // Predicated region
    $region45: #{lstm_model_forward.1} parent=5 // pred_check
      %p270 = pneg %p269
    $region46: #{lstm_model_forward.1} parent=5 // pred_check_branch
      %272 = sbr.rel (%p270) target = $region48
    $region47: #{lstm_model_forward.1} parent=5 // pred_region
      // Predicated region
      $region49: #{lstm_model_forward.1} parent=47 // pred_check
        %p273 = pneg %p35
      $region50: #{lstm_model_forward.1} parent=47 // pred_check_branch
        %275 = sbr.rel (%p273) target = $region52
      $region51: #{lstm_model_forward.1} parent=47 // pred_region
        %s276 = smul.u32 4, %s15
        %p277 = scmp.lt.s32.totalorder %s276, 7
        %s278 = scalar_select %p277, %s276, 7
        %s279 = smul.addr %s278, 8
        %s280 = scalar_lea.vmem %s0, %s279
        %s281 = smul.u32 4, %s15
      $region52: #{lstm_model_forward.1} parent=47 // pred_fallthru
        _
    $region48: #{lstm_model_forward.1} parent=5 // pred_fallthru
      _
    %p282 = scmp.le.s32.totalorder 1, %s15
    %p283 = scmp.lt.s32.totalorder %s15, 3
    %p284 = pnand %p282, %p283
    %p285 = pneg %p284
    // Predicated region
    $region53: #{lstm_model_forward.1} parent=5 // pred_check
      _
    $region54: #{lstm_model_forward.1} parent=5 // pred_check_branch
      %287 = sbr.rel (%p284) target = $region56
    $region55: #{lstm_model_forward.1} parent=5 // pred_region
      %s288 = ssub.s32 %s15, 1
      %s289 = smul.u32 4, %s20
      %p290 = scmp.lt.s32.totalorder %s289, 7
      %s291 = scalar_select %p290, %s289, 7
      %s292 = smul.addr %s291, 8
      %s293 = scalar_lea.vmem %s0, %s292
      %p294 = pneg %p41
      %p295 = pneg %p38
      %p296 = pneg %p62
      %p297 = pneg %p59
      %p298 = pneg %p83
      %p299 = pneg %p80
      %p300 = pneg %p104
      %p301 = pneg %p101
      %p302 = pneg %p125
      %p303 = pneg %p122
      %p304 = pneg %p146
      %p305 = pneg %p143
      %p306 = pneg %p167
      %p307 = pneg %p164
      %p308 = pneg %p188
      %p309 = pneg %p185
      %p310 = pneg %p209
      %p311 = pneg %p206
      %p312 = pneg %p230
      %p313 = pneg %p227
      %s314 = smul.u32 4, %s20
      %p315 = scmp.lt.s32.totalorder %s314, 7
      %s316 = scalar_select %p315, %s314, 7
      %s317 = smul.addr %s316, 8
      %s318 = scalar_lea.vmem %s0, %s317
      %s319 = smul.u32 4, %s20
      %p320 = scmp.eq.s32.totalorder %s20, 0
      // Predicated region
      $region57: #{lstm_model_forward.1} parent=55 // pred_check
        %p321 = pneg %p320
      $region58: #{lstm_model_forward.1} parent=55 // pred_check_branch
        %323 = sbr.rel (%p321) target = $region60
      $region59: #{lstm_model_forward.1} parent=55 // pred_region
        %vm324 = vcmask 261120
        %325 = vst.msk [vmem:[#allocation4] sm:$0xff] %vm324, 0.0
        %326 = vst.msk [vmem:[#allocation5] sm:$0xff] %vm324, 0.0
        %327 = vst.msk [vmem:[#allocation6] sm:$0xff] %vm324, 0.0
        %328 = vst.msk [vmem:[#allocation7] sm:$0xff] %vm324, 0.0
      $region60: #{lstm_model_forward.1} parent=55 // pred_fallthru
        _
      %v329 = vld [vmem:[%s318] sm:$0xff]
      %v330 = vld [vmem:[%s318 + $0x8] sm:$0xff]
      %v331 = vld [vmem:[%s318 + $0x10] sm:$0xff]
      %v332 = vld [vmem:[%s318 + $0x18] sm:$0xff]
      %v333 = vld [vmem:[%s1] sm:$0xff]
      %v334 = vld [vmem:[%s1 + $0x8] sm:$0xff]
      %v335 = vld [vmem:[%s3] sm:$0x1]
      %v337 = vlaneseq
      %v338 = vshrl.u32 %v337, 7
      %v339 = vsub.s32 0, %v338
      %v340 = vrot.slane %v335, %v339
      %vm342 = vcmask 130048
      %v344 = vsel %vm342, %v329, 0
      %v347 = vsel %vm342, %v330, 0
      %v350 = vsel %vm342, %v331, 0
      %v353 = vsel %vm342, %v332, 0
      %355 = vmatprep.subr.mxu0 0.0
      %356 = vmatpush1.msra.mxu0 %v333
      %357 = vmatprep.subr.mxu0 0.0
      %358 = vmatpush1.msra.mxu0 %v334
      %359 = vmatprep.subr.mxu0 0.0
      %360 = vmatpush1.msra.mxu0 0.0
      %361 = vmatprep.subr.mxu0 0.0
      %362 = vmatpush1.msra.mxu0 0.0
      %363 = vmatprep.subr.mxu0 0.0
      %364 = vmatpush1.msra.mxu0 0.0
      %365 = vmatprep.subr.mxu0 0.0
      %366 = vmatpush1.msra.mxu0 0.0
      %367 = vmatprep.subr.mxu0 0.0
      %368 = vmatpush1.msra.mxu0 0.0
      %369 = vmatprep.subr.mxu0 0.0
      %370 = vmatpush1.msra.mxu0 0.0
      %371 = vmatprep.subr.mxu0 0.0
      %372 = vmatpush1.msra.mxu0 0.0
      %373 = vmatprep.subr.mxu0 0.0
      %374 = vmatpush1.msra.mxu0 0.0
      %375 = vmatprep.subr.mxu0 0.0
      %376 = vmatpush1.msra.mxu0 0.0
      %377 = vmatprep.subr.mxu0 0.0
      %378 = vmatpush1.msra.mxu0 0.0
      %379 = vmatprep.subr.mxu0 0.0
      %380 = vmatpush1.msra.mxu0 0.0
      %381 = vmatprep.subr.mxu0 0.0
      %382 = vmatpush1.msra.mxu0 0.0
      %383 = vmatprep.subr.mxu0 0.0
      %384 = vmatpush1.msra.mxu0 0.0
      %385 = vmatprep.subr.mxu0 0.0
      %386 = vmatpush1.msra.mxu0 0.0
      %387 = vmatprep.subr.mxu0 0.0
      %388 = vmatpush1.msra.mxu0 0.0
      %389 = vmatprep.subr.mxu0 0.0
      %390 = vmatpush1.msra.mxu0 0.0
      %391 = vmatprep.subr.mxu0 0.0
      %392 = vmatpush1.msra.mxu0 0.0
      %393 = vmatprep.subr.mxu0 0.0
      %394 = vmatpush1.msra.mxu0 0.0
      %395 = vmatprep.subr.mxu0 0.0
      %396 = vmatpush1.msra.mxu0 0.0
      %397 = vmatprep.subr.mxu0 0.0
      %398 = vmatpush1.msra.mxu0 0.0
      %399 = vmatprep.subr.mxu0 0.0
      %400 = vmatpush1.msra.mxu0 0.0
      %401 = vmatprep.subr.mxu0 0.0
      %402 = vmatpush1.msra.mxu0 0.0
      %403 = vmatprep.subr.mxu0 0.0
      %404 = vmatpush1.msra.mxu0 0.0
      %405 = vmatprep.subr.mxu0 0.0
      %406 = vmatpush1.msra.mxu0 0.0
      %407 = vmatprep.subr.mxu0 0.0
      %408 = vmatpush1.msra.mxu0 0.0
      %409 = vmatprep.subr.mxu0 0.0
      %410 = vmatpush1.msra.mxu0 0.0
      %411 = vmatprep.subr.mxu0 0.0
      %412 = vmatpush1.msra.mxu0 0.0
      %413 = vmatprep.subr.mxu0 0.0
      %414 = vmatpush1.msra.mxu0 0.0
      %415 = vmatprep.subr.mxu0 0.0
      %416 = vmatpush1.msra.mxu0 0.0
      %417 = vmatprep.subr.mxu0 0.0
      %418 = vmatpush1.msra.mxu0 0.0
      %419 = vmatprep.mubr.f32.mxu0 0.0
      %420 = vmatmul.mubr.f32.gmra.mrb[0].mxu0 %v344
      %v421 = vpop.f32.mrb[0].mxu0
      %v422 = vadd.f32 %v340, %v421
      %v423 = vpop.f32.mrb[0].mxu0
      %424 = vmatprep.mubr.f32.mxu0 0.0
      %425 = vmatmul.mubr.f32.gmra.mrb[0].mxu0 %v347
      %v426 = vpop.f32.mrb[0].mxu0
      %v427 = vadd.f32 %v340, %v426
      %v428 = vpop.f32.mrb[0].mxu0
      %429 = vmatprep.mubr.f32.mxu0 0.0
      %430 = vmatmul.mubr.f32.gmra.mrb[0].mxu0 %v350
      %v431 = vpop.f32.mrb[0].mxu0
      %v432 = vadd.f32 %v340, %v431
      %v433 = vpop.f32.mrb[0].mxu0
      %434 = vmatprep.mubr.f32.mxu0 0.0
      %435 = vmatmul.mubr.f32.gmra.mrb[0].mxu0 %v353
      %v436 = vpop.f32.mrb[0].mxu0
      %v437 = vadd.f32 %v340, %v436
      %v438 = vpop.f32.mrb[0].mxu0
      %439 = vdwg.mxu0
      %440 = vst [vmem:[#allocation2] sm:$0xff] %v422
      %441 = vst [vmem:[#allocation2 + $0x8] sm:$0xff] %v427
      %442 = vst [vmem:[#allocation2 + $0x10] sm:$0xff] %v432
      %443 = vst [vmem:[#allocation2 + $0x18] sm:$0xff] %v437
      %v444 = vld [vmem:[%s2] sm:$0xff]
      %v445 = vld [vmem:[%s2 + $0x8] sm:$0xff]
      %v446 = vld [vmem:[%s2 + $0x10] sm:$0xff]
      %v447 = vld [vmem:[%s2 + $0x18] sm:$0xff]
      %v448 = vld [vmem:[#allocation4] sm:$0xff]
      %v449 = vld [vmem:[#allocation5] sm:$0xff]
      %v450 = vld [vmem:[#allocation2] sm:$0xff]
      %vm451 = vcmask 261120
      %v453 = vsel %vm451, %v448, 0
      %455 = vmatprep.subr.mxu0 0.0
      %456 = vmatpush1.msra.mxu0 %v444
      %457 = vmatprep.subr.mxu0 0.0
      %458 = vmatpush1.msra.mxu0 %v445
      %459 = vmatprep.subr.mxu0 0.0
      %460 = vmatpush1.msra.mxu0 %v446
      %461 = vmatprep.subr.mxu0 0.0
      %462 = vmatpush1.msra.mxu0 %v447
      %463 = vmatprep.subr.mxu0 0.0
      %464 = vmatpush1.msra.mxu0 0.0
      %465 = vmatprep.subr.mxu0 0.0
      %466 = vmatpush1.msra.mxu0 0.0
      %467 = vmatprep.subr.mxu0 0.0
      %468 = vmatpush1.msra.mxu0 0.0
      %469 = vmatprep.subr.mxu0 0.0
      %470 = vmatpush1.msra.mxu0 0.0
      %471 = vmatprep.subr.mxu0 0.0
      %472 = vmatpush1.msra.mxu0 0.0
      %473 = vmatprep.subr.mxu0 0.0
      %474 = vmatpush1.msra.mxu0 0.0
      %475 = vmatprep.subr.mxu0 0.0
      %476 = vmatpush1.msra.mxu0 0.0
      %477 = vmatprep.subr.mxu0 0.0
      %478 = vmatpush1.msra.mxu0 0.0
      %479 = vmatprep.subr.mxu0 0.0
      %480 = vmatpush1.msra.mxu0 0.0
      %481 = vmatprep.subr.mxu0 0.0
      %482 = vmatpush1.msra.mxu0 0.0
      %483 = vmatprep.subr.mxu0 0.0
      %484 = vmatpush1.msra.mxu0 0.0
      %485 = vmatprep.subr.mxu0 0.0
      %486 = vmatpush1.msra.mxu0 0.0
      %487 = vmatprep.subr.mxu0 0.0
      %488 = vmatpush1.msra.mxu0 0.0
      %489 = vmatprep.subr.mxu0 0.0
      %490 = vmatpush1.msra.mxu0 0.0
      %491 = vmatprep.subr.mxu0 0.0
      %492 = vmatpush1.msra.mxu0 0.0
      %493 = vmatprep.subr.mxu0 0.0
      %494 = vmatpush1.msra.mxu0 0.0
      %495 = vmatprep.subr.mxu0 0.0
      %496 = vmatpush1.msra.mxu0 0.0
      %497 = vmatprep.subr.mxu0 0.0
      %498 = vmatpush1.msra.mxu0 0.0
      %499 = vmatprep.subr.mxu0 0.0
      %500 = vmatpush1.msra.mxu0 0.0
      %501 = vmatprep.subr.mxu0 0.0
      %502 = vmatpush1.msra.mxu0 0.0
      %503 = vmatprep.subr.mxu0 0.0
      %504 = vmatpush1.msra.mxu0 0.0
      %505 = vmatprep.subr.mxu0 0.0
      %506 = vmatpush1.msra.mxu0 0.0
      %507 = vmatprep.subr.mxu0 0.0
      %508 = vmatpush1.msra.mxu0 0.0
      %509 = vmatprep.subr.mxu0 0.0
      %510 = vmatpush1.msra.mxu0 0.0
      %511 = vmatprep.subr.mxu0 0.0
      %512 = vmatpush1.msra.mxu0 0.0
      %513 = vmatprep.subr.mxu0 0.0
      %514 = vmatpush1.msra.mxu0 0.0
      %515 = vmatprep.subr.mxu0 0.0
      %516 = vmatpush1.msra.mxu0 0.0
      %517 = vmatprep.subr.mxu0 0.0
      %518 = vmatpush1.msra.mxu0 0.0
      %519 = vmatprep.mubr.f32.mxu0 0.0
      %520 = vmatmul.mubr.f32.gmra.mrb[0].mxu0 %v453
      %v521 = vpop.f32.mrb[0].mxu0
      %v522 = vadd.f32 0.0, %v521
      %v523 = vpop.f32.mrb[0].mxu0
      %524 = vdwg.mxu0
      %v525 = vadd.f32 %v450, %v522
      %v526 = vxor.u32 %v525, 2147483648
      %v527 = vmul.f32 %v526, 1.442695
      %v528 = vpow.pop %v527
      %v529 = vadd.f32 %v528, 1.0
      %v530 = vrcp.pop %v529
      %v531 = vmul.f32 1.0, %v530
      %v532 = vtanh.pop %v525
      %534 = vrot.lane.b32.xlu0 %v449, 32
      %v535 = vpop.permute.xlu0 %534
      %v537 = vmul.f32 %v531, %v535
      %539 = vrot.lane.b32.xlu0 %v532, 32
      %v540 = vpop.permute.xlu0 %539
      %v542 = vmul.f32 %v531, %v540
      %544 = vrot.lane.b32.xlu0 %v542, 32
      %v545 = vpop.permute.xlu0 %544
      %v547 = vadd.f32 %v537, %v545
      %v548 = vtanh.pop %v547
      %550 = vrot.lane.b32.xlu0 %v548, 32
      %v551 = vpop.permute.xlu0 %550
      %v553 = vmul.f32 %v531, %v551
      %555 = vrot.lane.b32.xlu0 %v553, 64
      %v556 = vpop.permute.xlu0 %555
      %558 = vst.msk [vmem:[#allocation3] sm:$0xff] %vm451, %v556
      %s559 = scalar_lea.vmem [#allocation2], 8
      %v560 = vld [vmem:[%s559] sm:$0xff]
      %v561 = vsel %vm451, %v556, 0
      %563 = vmatprep.subr.mxu0 0.0
      %564 = vmatpush1.msra.mxu0 %v444
      %565 = vmatprep.subr.mxu0 0.0
      %566 = vmatpush1.msra.mxu0 %v445
      %567 = vmatprep.subr.mxu0 0.0
      %568 = vmatpush1.msra.mxu0 %v446
      %569 = vmatprep.subr.mxu0 0.0
      %570 = vmatpush1.msra.mxu0 %v447
      %571 = vmatprep.subr.mxu0 0.0
      %572 = vmatpush1.msra.mxu0 0.0
      %573 = vmatprep.subr.mxu0 0.0
      %574 = vmatpush1.msra.mxu0 0.0
      %575 = vmatprep.subr.mxu0 0.0
      %576 = vmatpush1.msra.mxu0 0.0
      %577 = vmatprep.subr.mxu0 0.0
      %578 = vmatpush1.msra.mxu0 0.0
      %579 = vmatprep.subr.mxu0 0.0
      %580 = vmatpush1.msra.mxu0 0.0
      %581 = vmatprep.subr.mxu0 0.0
      %582 = vmatpush1.msra.mxu0 0.0
      %583 = vmatprep.subr.mxu0 0.0
      %584 = vmatpush1.msra.mxu0 0.0
      %585 = vmatprep.subr.mxu0 0.0
      %586 = vmatpush1.msra.mxu0 0.0
      %587 = vmatprep.subr.mxu0 0.0
      %588 = vmatpush1.msra.mxu0 0.0
      %589 = vmatprep.subr.mxu0 0.0
      %590 = vmatpush1.msra.mxu0 0.0
      %591 = vmatprep.subr.mxu0 0.0
      %592 = vmatpush1.msra.mxu0 0.0
      %593 = vmatprep.subr.mxu0 0.0
      %594 = vmatpush1.msra.mxu0 0.0
      %595 = vmatprep.subr.mxu0 0.0
      %596 = vmatpush1.msra.mxu0 0.0
      %597 = vmatprep.subr.mxu0 0.0
      %598 = vmatpush1.msra.mxu0 0.0
      %599 = vmatprep.subr.mxu0 0.0
      %600 = vmatpush1.msra.mxu0 0.0
      %601 = vmatprep.subr.mxu0 0.0
      %602 = vmatpush1.msra.mxu0 0.0
      %603 = vmatprep.subr.mxu0 0.0
      %604 = vmatpush1.msra.mxu0 0.0
      %605 = vmatprep.subr.mxu0 0.0
      %606 = vmatpush1.msra.mxu0 0.0
      %607 = vmatprep.subr.mxu0 0.0
      %608 = vmatpush1.msra.mxu0 0.0
      %609 = vmatprep.subr.mxu0 0.0
      %610 = vmatpush1.msra.mxu0 0.0
      %611 = vmatprep.subr.mxu0 0.0
      %612 = vmatpush1.msra.mxu0 0.0
      %613 = vmatprep.subr.mxu0 0.0
      %614 = vmatpush1.msra.mxu0 0.0
      %615 = vmatprep.subr.mxu0 0.0
      %616 = vmatpush1.msra.mxu0 0.0
      %617 = vmatprep.subr.mxu0 0.0
      %618 = vmatpush1.msra.mxu0 0.0
      %619 = vmatprep.subr.mxu0 0.0
      %620 = vmatpush1.msra.mxu0 0.0
      %621 = vmatprep.subr.mxu0 0.0
      %622 = vmatpush1.msra.mxu0 0.0
      %623 = vmatprep.subr.mxu0 0.0
      %624 = vmatpush1.msra.mxu0 0.0
      %625 = vmatprep.subr.mxu0 0.0
      %626 = vmatpush1.msra.mxu0 0.0
      %627 = vmatprep.mubr.f32.mxu0 0.0
      %628 = vmatmul.mubr.f32.gmra.mrb[0].mxu0 %v561
      %v629 = vpop.f32.mrb[0].mxu0
      %v630 = vadd.f32 0.0, %v629
      %v631 = vpop.f32.mrb[0].mxu0
      %632 = vdwg.mxu0
      %v633 = vadd.f32 %v560, %v630
      %v634 = vxor.u32 %v633, 2147483648
      %v635 = vmul.f32 %v634, 1.442695
      %v636 = vpow.pop %v635
      %v637 = vadd.f32 %v636, 1.0
      %v638 = vrcp.pop %v637
      %v639 = vmul.f32 1.0, %v638
      %v640 = vtanh.pop %v633
      %v641 = vmul.f32 %v639, %v547
      %643 = vrot.lane.b32.xlu0 %v640, 32
      %v644 = vpop.permute.xlu0 %643
      %v646 = vmul.f32 %v639, %v644
      %648 = vrot.lane.b32.xlu0 %v646, 32
      %v649 = vpop.permute.xlu0 %648
      %v651 = vadd.f32 %v641, %v649
      %v652 = vtanh.pop %v651
      %654 = vrot.lane.b32.xlu0 %v652, 32
      %v655 = vpop.permute.xlu0 %654
      %v657 = vmul.f32 %v639, %v655
      %659 = vrot.lane.b32.xlu0 %v657, 64
      %v660 = vpop.permute.xlu0 %659
      %s662 = scalar_lea.vmem [#allocation3], 8
      %663 = vst.msk [vmem:[%s662] sm:$0xff] %vm451, %v660
      %s664 = scalar_lea.vmem [#allocation2], 16
      %v665 = vld [vmem:[%s664] sm:$0xff]
      %v666 = vsel %vm451, %v660, 0
      %668 = vmatprep.subr.mxu0 0.0
      %669 = vmatpush1.msra.mxu0 %v444
      %670 = vmatprep.subr.mxu0 0.0
      %671 = vmatpush1.msra.mxu0 %v445
      %672 = vmatprep.subr.mxu0 0.0
      %673 = vmatpush1.msra.mxu0 %v446
      %674 = vmatprep.subr.mxu0 0.0
      %675 = vmatpush1.msra.mxu0 %v447
      %676 = vmatprep.subr.mxu0 0.0
      %677 = vmatpush1.msra.mxu0 0.0
      %678 = vmatprep.subr.mxu0 0.0
      %679 = vmatpush1.msra.mxu0 0.0
      %680 = vmatprep.subr.mxu0 0.0
      %681 = vmatpush1.msra.mxu0 0.0
      %682 = vmatprep.subr.mxu0 0.0
      %683 = vmatpush1.msra.mxu0 0.0
      %684 = vmatprep.subr.mxu0 0.0
      %685 = vmatpush1.msra.mxu0 0.0
      %686 = vmatprep.subr.mxu0 0.0
      %687 = vmatpush1.msra.mxu0 0.0
      %688 = vmatprep.subr.mxu0 0.0
      %689 = vmatpush1.msra.mxu0 0.0
      %690 = vmatprep.subr.mxu0 0.0
      %691 = vmatpush1.msra.mxu0 0.0
      %692 = vmatprep.subr.mxu0 0.0
      %693 = vmatpush1.msra.mxu0 0.0
      %694 = vmatprep.subr.mxu0 0.0
      %695 = vmatpush1.msra.mxu0 0.0
      %696 = vmatprep.subr.mxu0 0.0
      %697 = vmatpush1.msra.mxu0 0.0
      %698 = vmatprep.subr.mxu0 0.0
      %699 = vmatpush1.msra.mxu0 0.0
      %700 = vmatprep.subr.mxu0 0.0
      %701 = vmatpush1.msra.mxu0 0.0
      %702 = vmatprep.subr.mxu0 0.0
      %703 = vmatpush1.msra.mxu0 0.0
      %704 = vmatprep.subr.mxu0 0.0
      %705 = vmatpush1.msra.mxu0 0.0
      %706 = vmatprep.subr.mxu0 0.0
      %707 = vmatpush1.msra.mxu0 0.0
      %708 = vmatprep.subr.mxu0 0.0
      %709 = vmatpush1.msra.mxu0 0.0
      %710 = vmatprep.subr.mxu0 0.0
      %711 = vmatpush1.msra.mxu0 0.0
      %712 = vmatprep.subr.mxu0 0.0
      %713 = vmatpush1.msra.mxu0 0.0
      %714 = vmatprep.subr.mxu0 0.0
      %715 = vmatpush1.msra.mxu0 0.0
      %716 = vmatprep.subr.mxu0 0.0
      %717 = vmatpush1.msra.mxu0 0.0
      %718 = vmatprep.subr.mxu0 0.0
      %719 = vmatpush1.msra.mxu0 0.0
      %720 = vmatprep.subr.mxu0 0.0
      %721 = vmatpush1.msra.mxu0 0.0
      %722 = vmatprep.subr.mxu0 0.0
      %723 = vmatpush1.msra.mxu0 0.0
      %724 = vmatprep.subr.mxu0 0.0
      %725 = vmatpush1.msra.mxu0 0.0
      %726 = vmatprep.subr.mxu0 0.0
      %727 = vmatpush1.msra.mxu0 0.0
      %728 = vmatprep.subr.mxu0 0.0
      %729 = vmatpush1.msra.mxu0 0.0
      %730 = vmatprep.subr.mxu0 0.0
      %731 = vmatpush1.msra.mxu0 0.0
      %732 = vmatprep.mubr.f32.mxu0 0.0
      %733 = vmatmul.mubr.f32.gmra.mrb[0].mxu0 %v666
      %v734 = vpop.f32.mrb[0].mxu0
      %v735 = vadd.f32 0.0, %v734
      %v736 = vpop.f32.mrb[0].mxu0
      %737 = vdwg.mxu0
      %v738 = vadd.f32 %v665, %v735
      %v739 = vxor.u32 %v738, 2147483648
      %v740 = vmul.f32 %v739, 1.442695
      %v741 = vpow.pop %v740
      %v742 = vadd.f32 %v741, 1.0
      %v743 = vrcp.pop %v742
      %v744 = vmul.f32 1.0, %v743
      %v745 = vtanh.pop %v738
      %v746 = vmul.f32 %v744, %v651
      %748 = vrot.lane.b32.xlu0 %v745, 32
      %v749 = vpop.permute.xlu0 %748
      %v751 = vmul.f32 %v744, %v749
      %753 = vrot.lane.b32.xlu0 %v751, 32
      %v754 = vpop.permute.xlu0 %753
      %v756 = vadd.f32 %v746, %v754
      %v757 = vtanh.pop %v756
      %759 = vrot.lane.b32.xlu0 %v757, 32
      %v760 = vpop.permute.xlu0 %759
      %v762 = vmul.f32 %v744, %v760
      %764 = vrot.lane.b32.xlu0 %v762, 64
      %v765 = vpop.permute.xlu0 %764
      %s767 = scalar_lea.vmem [#allocation3], 16
      %768 = vst.msk [vmem:[%s767] sm:$0xff] %vm451, %v765
      %s769 = scalar_lea.vmem [#allocation2], 24
      %v770 = vld [vmem:[%s769] sm:$0xff]
      %v771 = vsel %vm451, %v765, 0
      %773 = vmatprep.subr.mxu0 0.0
      %774 = vmatpush1.msra.mxu0 %v444
      %775 = vmatprep.subr.mxu0 0.0
      %776 = vmatpush1.msra.mxu0 %v445
      %777 = vmatprep.subr.mxu0 0.0
      %778 = vmatpush1.msra.mxu0 %v446
      %779 = vmatprep.subr.mxu0 0.0
      %780 = vmatpush1.msra.mxu0 %v447
      %781 = vmatprep.subr.mxu0 0.0
      %782 = vmatpush1.msra.mxu0 0.0
      %783 = vmatprep.subr.mxu0 0.0
      %784 = vmatpush1.msra.mxu0 0.0
      %785 = vmatprep.subr.mxu0 0.0
      %786 = vmatpush1.msra.mxu0 0.0
      %787 = vmatprep.subr.mxu0 0.0
      %788 = vmatpush1.msra.mxu0 0.0
      %789 = vmatprep.subr.mxu0 0.0
      %790 = vmatpush1.msra.mxu0 0.0
      %791 = vmatprep.subr.mxu0 0.0
      %792 = vmatpush1.msra.mxu0 0.0
      %793 = vmatprep.subr.mxu0 0.0
      %794 = vmatpush1.msra.mxu0 0.0
      %795 = vmatprep.subr.mxu0 0.0
      %796 = vmatpush1.msra.mxu0 0.0
      %797 = vmatprep.subr.mxu0 0.0
      %798 = vmatpush1.msra.mxu0 0.0
      %799 = vmatprep.subr.mxu0 0.0
      %800 = vmatpush1.msra.mxu0 0.0
      %801 = vmatprep.subr.mxu0 0.0
      %802 = vmatpush1.msra.mxu0 0.0
      %803 = vmatprep.subr.mxu0 0.0
      %804 = vmatpush1.msra.mxu0 0.0
      %805 = vmatprep.subr.mxu0 0.0
      %806 = vmatpush1.msra.mxu0 0.0
      %807 = vmatprep.subr.mxu0 0.0
      %808 = vmatpush1.msra.mxu0 0.0
      %809 = vmatprep.subr.mxu0 0.0
      %810 = vmatpush1.msra.mxu0 0.0
      %811 = vmatprep.subr.mxu0 0.0
      %812 = vmatpush1.msra.mxu0 0.0
      %813 = vmatprep.subr.mxu0 0.0
      %814 = vmatpush1.msra.mxu0 0.0
      %815 = vmatprep.subr.mxu0 0.0
      %816 = vmatpush1.msra.mxu0 0.0
      %817 = vmatprep.subr.mxu0 0.0
      %818 = vmatpush1.msra.mxu0 0.0
      %819 = vmatprep.subr.mxu0 0.0
      %820 = vmatpush1.msra.mxu0 0.0
      %821 = vmatprep.subr.mxu0 0.0
      %822 = vmatpush1.msra.mxu0 0.0
      %823 = vmatprep.subr.mxu0 0.0
      %824 = vmatpush1.msra.mxu0 0.0
      %825 = vmatprep.subr.mxu0 0.0
      %826 = vmatpush1.msra.mxu0 0.0
      %827 = vmatprep.subr.mxu0 0.0
      %828 = vmatpush1.msra.mxu0 0.0
      %829 = vmatprep.subr.mxu0 0.0
      %830 = vmatpush1.msra.mxu0 0.0
      %831 = vmatprep.subr.mxu0 0.0
      %832 = vmatpush1.msra.mxu0 0.0
      %833 = vmatprep.subr.mxu0 0.0
      %834 = vmatpush1.msra.mxu0 0.0
      %835 = vmatprep.subr.mxu0 0.0
      %836 = vmatpush1.msra.mxu0 0.0
      %837 = vmatprep.mubr.f32.mxu0 0.0
      %838 = vmatmul.mubr.f32.gmra.mrb[0].mxu0 %v771
      %v839 = vpop.f32.mrb[0].mxu0
      %v840 = vadd.f32 0.0, %v839
      %v841 = vpop.f32.mrb[0].mxu0
      %842 = vdwg.mxu0
      %v843 = vadd.f32 %v770, %v840
      %v844 = vxor.u32 %v843, 2147483648
      %v845 = vmul.f32 %v844, 1.442695
      %v846 = vpow.pop %v845
      %v847 = vadd.f32 %v846, 1.0
      %v848 = vrcp.pop %v847
      %v849 = vmul.f32 1.0, %v848
      %v850 = vtanh.pop %v843
      %v851 = vmul.f32 %v849, %v756
      %853 = vrot.lane.b32.xlu0 %v850, 32
      %v854 = vpop.permute.xlu0 %853
      %v856 = vmul.f32 %v849, %v854
      %858 = vrot.lane.b32.xlu0 %v856, 32
      %v859 = vpop.permute.xlu0 %858
      %v861 = vadd.f32 %v851, %v859
      %v862 = vtanh.pop %v861
      %864 = vrot.lane.b32.xlu0 %v862, 32
      %v865 = vpop.permute.xlu0 %864
      %v867 = vmul.f32 %v849, %v865
      %869 = vrot.lane.b32.xlu0 %v867, 64
      %v870 = vpop.permute.xlu0 %869
      %s872 = scalar_lea.vmem [#allocation3], 24
      %873 = vst.msk [vmem:[%s872] sm:$0xff] %vm451, %v870
      %874 = vst.msk [vmem:[#allocation4] sm:$0xff] %vm451, %v870
      %876 = vrot.lane.b32.xlu0 %v861, 96
      %v877 = vpop.permute.xlu0 %876
      %879 = vst.msk [vmem:[#allocation5] sm:$0xff] %vm451, %v877
      %v880 = vld [vmem:[#allocation3] sm:$0xff]
      %v881 = vld [vmem:[#allocation3 + $0x8] sm:$0xff]
      %v882 = vld [vmem:[#allocation3 + $0x10] sm:$0xff]
      %v883 = vld [vmem:[#allocation3 + $0x18] sm:$0xff]
      %v884 = vld [vmem:[%s4] sm:$0xff]
      %v885 = vld [vmem:[%s4 + $0x8] sm:$0xff]
      %v886 = vld [vmem:[%s4 + $0x10] sm:$0xff]
      %v887 = vld [vmem:[%s4 + $0x18] sm:$0xff]
      %v888 = vld [vmem:[%s6] sm:$0x1]
      %v890 = vlaneseq
      %v891 = vshrl.u32 %v890, 7
      %v892 = vsub.s32 0, %v891
      %v893 = vrot.slane %v888, %v892
      %v896 = vsel %vm451, %v880, 0
      %v899 = vsel %vm451, %v881, 0
      %v902 = vsel %vm451, %v882, 0
      %v905 = vsel %vm451, %v883, 0
      %907 = vmatprep.subr.mxu0 0.0
      %908 = vmatpush1.msra.mxu0 %v884
      %909 = vmatprep.subr.mxu0 0.0
      %910 = vmatpush1.msra.mxu0 %v885
      %911 = vmatprep.subr.mxu0 0.0
      %912 = vmatpush1.msra.mxu0 %v886
      %913 = vmatprep.subr.mxu0 0.0
      %914 = vmatpush1.msra.mxu0 %v887
      %915 = vmatprep.subr.mxu0 0.0
      %916 = vmatpush1.msra.mxu0 0.0
      %917 = vmatprep.subr.mxu0 0.0
      %918 = vmatpush1.msra.mxu0 0.0
      %919 = vmatprep.subr.mxu0 0.0
      %920 = vmatpush1.msra.mxu0 0.0
      %921 = vmatprep.subr.mxu0 0.0
      %922 = vmatpush1.msra.mxu0 0.0
      %923 = vmatprep.subr.mxu0 0.0
      %924 = vmatpush1.msra.mxu0 0.0
      %925 = vmatprep.subr.mxu0 0.0
      %926 = vmatpush1.msra.mxu0 0.0
      %927 = vmatprep.subr.mxu0 0.0
      %928 = vmatpush1.msra.mxu0 0.0
      %929 = vmatprep.subr.mxu0 0.0
      %930 = vmatpush1.msra.mxu0 0.0
      %931 = vmatprep.subr.mxu0 0.0
      %932 = vmatpush1.msra.mxu0 0.0
      %933 = vmatprep.subr.mxu0 0.0
      %934 = vmatpush1.msra.mxu0 0.0
      %935 = vmatprep.subr.mxu0 0.0
      %936 = vmatpush1.msra.mxu0 0.0
      %937 = vmatprep.subr.mxu0 0.0
      %938 = vmatpush1.msra.mxu0 0.0
      %939 = vmatprep.subr.mxu0 0.0
      %940 = vmatpush1.msra.mxu0 0.0
      %941 = vmatprep.subr.mxu0 0.0
      %942 = vmatpush1.msra.mxu0 0.0
      %943 = vmatprep.subr.mxu0 0.0
      %944 = vmatpush1.msra.mxu0 0.0
      %945 = vmatprep.subr.mxu0 0.0
      %946 = vmatpush1.msra.mxu0 0.0
      %947 = vmatprep.subr.mxu0 0.0
      %948 = vmatpush1.msra.mxu0 0.0
      %949 = vmatprep.subr.mxu0 0.0
      %950 = vmatpush1.msra.mxu0 0.0
      %951 = vmatprep.subr.mxu0 0.0
      %952 = vmatpush1.msra.mxu0 0.0
      %953 = vmatprep.subr.mxu0 0.0
      %954 = vmatpush1.msra.mxu0 0.0
      %955 = vmatprep.subr.mxu0 0.0
      %956 = vmatpush1.msra.mxu0 0.0
      %957 = vmatprep.subr.mxu0 0.0
      %958 = vmatpush1.msra.mxu0 0.0
      %959 = vmatprep.subr.mxu0 0.0
      %960 = vmatpush1.msra.mxu0 0.0
      %961 = vmatprep.subr.mxu0 0.0
      %962 = vmatpush1.msra.mxu0 0.0
      %963 = vmatprep.subr.mxu0 0.0
      %964 = vmatpush1.msra.mxu0 0.0
      %965 = vmatprep.subr.mxu0 0.0
      %966 = vmatpush1.msra.mxu0 0.0
      %967 = vmatprep.subr.mxu0 0.0
      %968 = vmatpush1.msra.mxu0 0.0
      %969 = vmatprep.subr.mxu0 0.0
      %970 = vmatpush1.msra.mxu0 0.0
      %971 = vmatprep.mubr.f32.mxu0 0.0
      %972 = vmatmul.mubr.f32.gmra.mrb[0].mxu0 %v896
      %v973 = vpop.f32.mrb[0].mxu0
      %v974 = vadd.f32 %v893, %v973
      %v975 = vpop.f32.mrb[0].mxu0
      %976 = vmatprep.mubr.f32.mxu0 0.0
      %977 = vmatmul.mubr.f32.gmra.mrb[0].mxu0 %v899
      %v978 = vpop.f32.mrb[0].mxu0
      %v979 = vadd.f32 %v893, %v978
      %v980 = vpop.f32.mrb[0].mxu0
      %981 = vmatprep.mubr.f32.mxu0 0.0
      %982 = vmatmul.mubr.f32.gmra.mrb[0].mxu0 %v902
      %v983 = vpop.f32.mrb[0].mxu0
      %v984 = vadd.f32 %v893, %v983
      %v985 = vpop.f32.mrb[0].mxu0
      %986 = vmatprep.mubr.f32.mxu0 0.0
      %987 = vmatmul.mubr.f32.gmra.mrb[0].mxu0 %v905
      %v988 = vpop.f32.mrb[0].mxu0
      %v989 = vadd.f32 %v893, %v988
      %v990 = vpop.f32.mrb[0].mxu0
      %991 = vdwg.mxu0
      %992 = vst [vmem:[#allocation2] sm:$0xff] %v974
      %993 = vst [vmem:[#allocation2 + $0x8] sm:$0xff] %v979
      %994 = vst [vmem:[#allocation2 + $0x10] sm:$0xff] %v984
      %995 = vst [vmem:[#allocation2 + $0x18] sm:$0xff] %v989
      %v996 = vld [vmem:[%s5] sm:$0xff]
      %v997 = vld [vmem:[%s5 + $0x8] sm:$0xff]
      %v998 = vld [vmem:[%s5 + $0x10] sm:$0xff]
      %v999 = vld [vmem:[%s5 + $0x18] sm:$0xff]
      %v1000 = vld [vmem:[#allocation6] sm:$0xff]
      %v1001 = vld [vmem:[#allocation7] sm:$0xff]
      %v1002 = vld [vmem:[#allocation2] sm:$0xff]
      %v1004 = vsel %vm451, %v1000, 0
      %1006 = vmatprep.subr.mxu0 0.0
      %1007 = vmatpush1.msra.mxu0 %v996
      %1008 = vmatprep.subr.mxu0 0.0
      %1009 = vmatpush1.msra.mxu0 %v997
      %1010 = vmatprep.subr.mxu0 0.0
      %1011 = vmatpush1.msra.mxu0 %v998
      %1012 = vmatprep.subr.mxu0 0.0
      %1013 = vmatpush1.msra.mxu0 %v999
      %1014 = vmatprep.subr.mxu0 0.0
      %1015 = vmatpush1.msra.mxu0 0.0
      %1016 = vmatprep.subr.mxu0 0.0
      %1017 = vmatpush1.msra.mxu0 0.0
      %1018 = vmatprep.subr.mxu0 0.0
      %1019 = vmatpush1.msra.mxu0 0.0
      %1020 = vmatprep.subr.mxu0 0.0
      %1021 = vmatpush1.msra.mxu0 0.0
      %1022 = vmatprep.subr.mxu0 0.0
      %1023 = vmatpush1.msra.mxu0 0.0
      %1024 = vmatprep.subr.mxu0 0.0
      %1025 = vmatpush1.msra.mxu0 0.0
      %1026 = vmatprep.subr.mxu0 0.0
      %1027 = vmatpush1.msra.mxu0 0.0
      %1028 = vmatprep.subr.mxu0 0.0
      %1029 = vmatpush1.msra.mxu0 0.0
      %1030 = vmatprep.subr.mxu0 0.0
      %1031 = vmatpush1.msra.mxu0 0.0
      %1032 = vmatprep.subr.mxu0 0.0
      %1033 = vmatpush1.msra.mxu0 0.0
      %1034 = vmatprep.subr.mxu0 0.0
      %1035 = vmatpush1.msra.mxu0 0.0
      %1036 = vmatprep.subr.mxu0 0.0
      %1037 = vmatpush1.msra.mxu0 0.0
      %1038 = vmatprep.subr.mxu0 0.0
      %1039 = vmatpush1.msra.mxu0 0.0
      %1040 = vmatprep.subr.mxu0 0.0
      %1041 = vmatpush1.msra.mxu0 0.0
      %1042 = vmatprep.subr.mxu0 0.0
      %1043 = vmatpush1.msra.mxu0 0.0
      %1044 = vmatprep.subr.mxu0 0.0
      %1045 = vmatpush1.msra.mxu0 0.0
      %1046 = vmatprep.subr.mxu0 0.0
      %1047 = vmatpush1.msra.mxu0 0.0
      %1048 = vmatprep.subr.mxu0 0.0
      %1049 = vmatpush1.msra.mxu0 0.0
      %1050 = vmatprep.subr.mxu0 0.0
      %1051 = vmatpush1.msra.mxu0 0.0
      %1052 = vmatprep.subr.mxu0 0.0
      %1053 = vmatpush1.msra.mxu0 0.0
      %1054 = vmatprep.subr.mxu0 0.0
      %1055 = vmatpush1.msra.mxu0 0.0
      %1056 = vmatprep.subr.mxu0 0.0
      %1057 = vmatpush1.msra.mxu0 0.0
      %1058 = vmatprep.subr.mxu0 0.0
      %1059 = vmatpush1.msra.mxu0 0.0
      %1060 = vmatprep.subr.mxu0 0.0
      %1061 = vmatpush1.msra.mxu0 0.0
      %1062 = vmatprep.subr.mxu0 0.0
      %1063 = vmatpush1.msra.mxu0 0.0
      %1064 = vmatprep.subr.mxu0 0.0
      %1065 = vmatpush1.msra.mxu0 0.0
      %1066 = vmatprep.subr.mxu0 0.0
      %1067 = vmatpush1.msra.mxu0 0.0
      %1068 = vmatprep.subr.mxu0 0.0
      %1069 = vmatpush1.msra.mxu0 0.0
      %1070 = vmatprep.mubr.f32.mxu0 0.0
      %1071 = vmatmul.mubr.f32.gmra.mrb[0].mxu0 %v1004
      %v1072 = vpop.f32.mrb[0].mxu0
      %v1073 = vadd.f32 0.0, %v1072
      %v1074 = vpop.f32.mrb[0].mxu0
      %1075 = vdwg.mxu0
      %v1076 = vadd.f32 %v1002, %v1073
      %v1077 = vxor.u32 %v1076, 2147483648
      %v1078 = vmul.f32 %v1077, 1.442695
      %v1079 = vpow.pop %v1078
      %v1080 = vadd.f32 %v1079, 1.0
      %v1081 = vrcp.pop %v1080
      %v1082 = vmul.f32 1.0, %v1081
      %v1083 = vtanh.pop %v1076
      %1085 = vrot.lane.b32.xlu0 %v1001, 32
      %v1086 = vpop.permute.xlu0 %1085
      %v1088 = vmul.f32 %v1082, %v1086
      %1090 = vrot.lane.b32.xlu0 %v1083, 32
      %v1091 = vpop.permute.xlu0 %1090
      %v1093 = vmul.f32 %v1082, %v1091
      %1095 = vrot.lane.b32.xlu0 %v1093, 32
      %v1096 = vpop.permute.xlu0 %1095
      %v1098 = vadd.f32 %v1088, %v1096
      %v1099 = vtanh.pop %v1098
      %1101 = vrot.lane.b32.xlu0 %v1099, 32
      %v1102 = vpop.permute.xlu0 %1101
      %v1104 = vmul.f32 %v1082, %v1102
      %v1105 = vld [vmem:[%s559] sm:$0xff]
      %1107 = vrot.lane.b32.xlu0 %v1104, 64
      %v1108 = vpop.permute.xlu0 %1107
      %v1109 = vsel %vm451, %v1108, 0
      %1111 = vmatprep.subr.mxu0 0.0
      %1112 = vmatpush1.msra.mxu0 %v996
      %1113 = vmatprep.subr.mxu0 0.0
      %1114 = vmatpush1.msra.mxu0 %v997
      %1115 = vmatprep.subr.mxu0 0.0
      %1116 = vmatpush1.msra.mxu0 %v998
      %1117 = vmatprep.subr.mxu0 0.0
      %1118 = vmatpush1.msra.mxu0 %v999
      %1119 = vmatprep.subr.mxu0 0.0
      %1120 = vmatpush1.msra.mxu0 0.0
      %1121 = vmatprep.subr.mxu0 0.0
      %1122 = vmatpush1.msra.mxu0 0.0
      %1123 = vmatprep.subr.mxu0 0.0
      %1124 = vmatpush1.msra.mxu0 0.0
      %1125 = vmatprep.subr.mxu0 0.0
      %1126 = vmatpush1.msra.mxu0 0.0
      %1127 = vmatprep.subr.mxu0 0.0
      %1128 = vmatpush1.msra.mxu0 0.0
      %1129 = vmatprep.subr.mxu0 0.0
      %1130 = vmatpush1.msra.mxu0 0.0
      %1131 = vmatprep.subr.mxu0 0.0
      %1132 = vmatpush1.msra.mxu0 0.0
      %1133 = vmatprep.subr.mxu0 0.0
      %1134 = vmatpush1.msra.mxu0 0.0
      %1135 = vmatprep.subr.mxu0 0.0
      %1136 = vmatpush1.msra.mxu0 0.0
      %1137 = vmatprep.subr.mxu0 0.0
      %1138 = vmatpush1.msra.mxu0 0.0
      %1139 = vmatprep.subr.mxu0 0.0
      %1140 = vmatpush1.msra.mxu0 0.0
      %1141 = vmatprep.subr.mxu0 0.0
      %1142 = vmatpush1.msra.mxu0 0.0
      %1143 = vmatprep.subr.mxu0 0.0
      %1144 = vmatpush1.msra.mxu0 0.0
      %1145 = vmatprep.subr.mxu0 0.0
      %1146 = vmatpush1.msra.mxu0 0.0
      %1147 = vmatprep.subr.mxu0 0.0
      %1148 = vmatpush1.msra.mxu0 0.0
      %1149 = vmatprep.subr.mxu0 0.0
      %1150 = vmatpush1.msra.mxu0 0.0
      %1151 = vmatprep.subr.mxu0 0.0
      %1152 = vmatpush1.msra.mxu0 0.0
      %1153 = vmatprep.subr.mxu0 0.0
      %1154 = vmatpush1.msra.mxu0 0.0
      %1155 = vmatprep.subr.mxu0 0.0
      %1156 = vmatpush1.msra.mxu0 0.0
      %1157 = vmatprep.subr.mxu0 0.0
      %1158 = vmatpush1.msra.mxu0 0.0
      %1159 = vmatprep.subr.mxu0 0.0
      %1160 = vmatpush1.msra.mxu0 0.0
      %1161 = vmatprep.subr.mxu0 0.0
      %1162 = vmatpush1.msra.mxu0 0.0
      %1163 = vmatprep.subr.mxu0 0.0
      %1164 = vmatpush1.msra.mxu0 0.0
      %1165 = vmatprep.subr.mxu0 0.0
      %1166 = vmatpush1.msra.mxu0 0.0
      %1167 = vmatprep.subr.mxu0 0.0
      %1168 = vmatpush1.msra.mxu0 0.0
      %1169 = vmatprep.subr.mxu0 0.0
      %1170 = vmatpush1.msra.mxu0 0.0
      %1171 = vmatprep.subr.mxu0 0.0
      %1172 = vmatpush1.msra.mxu0 0.0
      %1173 = vmatprep.subr.mxu0 0.0
      %1174 = vmatpush1.msra.mxu0 0.0
      %1175 = vmatprep.mubr.f32.mxu0 0.0
      %1176 = vmatmul.mubr.f32.gmra.mrb[0].mxu0 %v1109
      %v1177 = vpop.f32.mrb[0].mxu0
      %v1178 = vadd.f32 0.0, %v1177
      %v1179 = vpop.f32.mrb[0].mxu0
      %1180 = vdwg.mxu0
      %v1181 = vadd.f32 %v1105, %v1178
      %v1182 = vxor.u32 %v1181, 2147483648
      %v1183 = vmul.f32 %v1182, 1.442695
      %v1184 = vpow.pop %v1183
      %v1185 = vadd.f32 %v1184, 1.0
      %v1186 = vrcp.pop %v1185
      %v1187 = vmul.f32 1.0, %v1186
      %v1188 = vtanh.pop %v1181
      %v1189 = vmul.f32 %v1187, %v1098
      %1191 = vrot.lane.b32.xlu0 %v1188, 32
      %v1192 = vpop.permute.xlu0 %1191
      %v1194 = vmul.f32 %v1187, %v1192
      %1196 = vrot.lane.b32.xlu0 %v1194, 32
      %v1197 = vpop.permute.xlu0 %1196
      %v1199 = vadd.f32 %v1189, %v1197
      %v1200 = vtanh.pop %v1199
      %1202 = vrot.lane.b32.xlu0 %v1200, 32
      %v1203 = vpop.permute.xlu0 %1202
      %v1205 = vmul.f32 %v1187, %v1203
      %v1206 = vld [vmem:[%s664] sm:$0xff]
      %1208 = vrot.lane.b32.xlu0 %v1205, 64
      %v1209 = vpop.permute.xlu0 %1208
      %v1210 = vsel %vm451, %v1209, 0
      %1212 = vmatprep.subr.mxu0 0.0
      %1213 = vmatpush1.msra.mxu0 %v996
      %1214 = vmatprep.subr.mxu0 0.0
      %1215 = vmatpush1.msra.mxu0 %v997
      %1216 = vmatprep.subr.mxu0 0.0
      %1217 = vmatpush1.msra.mxu0 %v998
      %1218 = vmatprep.subr.mxu0 0.0
      %1219 = vmatpush1.msra.mxu0 %v999
      %1220 = vmatprep.subr.mxu0 0.0
      %1221 = vmatpush1.msra.mxu0 0.0
      %1222 = vmatprep.subr.mxu0 0.0
      %1223 = vmatpush1.msra.mxu0 0.0
      %1224 = vmatprep.subr.mxu0 0.0
      %1225 = vmatpush1.msra.mxu0 0.0
      %1226 = vmatprep.subr.mxu0 0.0
      %1227 = vmatpush1.msra.mxu0 0.0
      %1228 = vmatprep.subr.mxu0 0.0
      %1229 = vmatpush1.msra.mxu0 0.0
      %1230 = vmatprep.subr.mxu0 0.0
      %1231 = vmatpush1.msra.mxu0 0.0
      %1232 = vmatprep.subr.mxu0 0.0
      %1233 = vmatpush1.msra.mxu0 0.0
      %1234 = vmatprep.subr.mxu0 0.0
      %1235 = vmatpush1.msra.mxu0 0.0
      %1236 = vmatprep.subr.mxu0 0.0
      %1237 = vmatpush1.msra.mxu0 0.0
      %1238 = vmatprep.subr.mxu0 0.0
      %1239 = vmatpush1.msra.mxu0 0.0
      %1240 = vmatprep.subr.mxu0 0.0
      %1241 = vmatpush1.msra.mxu0 0.0
      %1242 = vmatprep.subr.mxu0 0.0
      %1243 = vmatpush1.msra.mxu0 0.0
      %1244 = vmatprep.subr.mxu0 0.0
      %1245 = vmatpush1.msra.mxu0 0.0
      %1246 = vmatprep.subr.mxu0 0.0
      %1247 = vmatpush1.msra.mxu0 0.0
      %1248 = vmatprep.subr.mxu0 0.0
      %1249 = vmatpush1.msra.mxu0 0.0
      %1250 = vmatprep.subr.mxu0 0.0
      %1251 = vmatpush1.msra.mxu0 0.0
      %1252 = vmatprep.subr.mxu0 0.0
      %1253 = vmatpush1.msra.mxu0 0.0
      %1254 = vmatprep.subr.mxu0 0.0
      %1255 = vmatpush1.msra.mxu0 0.0
      %1256 = vmatprep.subr.mxu0 0.0
      %1257 = vmatpush1.msra.mxu0 0.0
      %1258 = vmatprep.subr.mxu0 0.0
      %1259 = vmatpush1.msra.mxu0 0.0
      %1260 = vmatprep.subr.mxu0 0.0
      %1261 = vmatpush1.msra.mxu0 0.0
      %1262 = vmatprep.subr.mxu0 0.0
      %1263 = vmatpush1.msra.mxu0 0.0
      %1264 = vmatprep.subr.mxu0 0.0
      %1265 = vmatpush1.msra.mxu0 0.0
      %1266 = vmatprep.subr.mxu0 0.0
      %1267 = vmatpush1.msra.mxu0 0.0
      %1268 = vmatprep.subr.mxu0 0.0
      %1269 = vmatpush1.msra.mxu0 0.0
      %1270 = vmatprep.subr.mxu0 0.0
      %1271 = vmatpush1.msra.mxu0 0.0
      %1272 = vmatprep.subr.mxu0 0.0
      %1273 = vmatpush1.msra.mxu0 0.0
      %1274 = vmatprep.subr.mxu0 0.0
      %1275 = vmatpush1.msra.mxu0 0.0
      %1276 = vmatprep.mubr.f32.mxu0 0.0
      %1277 = vmatmul.mubr.f32.gmra.mrb[0].mxu0 %v1210
      %v1278 = vpop.f32.mrb[0].mxu0
      %v1279 = vadd.f32 0.0, %v1278
      %v1280 = vpop.f32.mrb[0].mxu0
      %1281 = vdwg.mxu0
      %v1282 = vadd.f32 %v1206, %v1279
      %v1283 = vxor.u32 %v1282, 2147483648
      %v1284 = vmul.f32 %v1283, 1.442695
      %v1285 = vpow.pop %v1284
      %v1286 = vadd.f32 %v1285, 1.0
      %v1287 = vrcp.pop %v1286
      %v1288 = vmul.f32 1.0, %v1287
      %v1289 = vtanh.pop %v1282
      %v1290 = vmul.f32 %v1288, %v1199
      %1292 = vrot.lane.b32.xlu0 %v1289, 32
      %v1293 = vpop.permute.xlu0 %1292
      %v1295 = vmul.f32 %v1288, %v1293
      %1297 = vrot.lane.b32.xlu0 %v1295, 32
      %v1298 = vpop.permute.xlu0 %1297
      %v1300 = vadd.f32 %v1290, %v1298
      %v1301 = vtanh.pop %v1300
      %1303 = vrot.lane.b32.xlu0 %v1301, 32
      %v1304 = vpop.permute.xlu0 %1303
      %v1306 = vmul.f32 %v1288, %v1304
      %v1307 = vld [vmem:[%s769] sm:$0xff]
      %1309 = vrot.lane.b32.xlu0 %v1306, 64
      %v1310 = vpop.permute.xlu0 %1309
      %v1311 = vsel %vm451, %v1310, 0
      %1313 = vmatprep.subr.mxu0 0.0
      %1314 = vmatpush1.msra.mxu0 %v996
      %1315 = vmatprep.subr.mxu0 0.0
      %1316 = vmatpush1.msra.mxu0 %v997
      %1317 = vmatprep.subr.mxu0 0.0
      %1318 = vmatpush1.msra.mxu0 %v998
      %1319 = vmatprep.subr.mxu0 0.0
      %1320 = vmatpush1.msra.mxu0 %v999
      %1321 = vmatprep.subr.mxu0 0.0
      %1322 = vmatpush1.msra.mxu0 0.0
      %1323 = vmatprep.subr.mxu0 0.0
      %1324 = vmatpush1.msra.mxu0 0.0
      %1325 = vmatprep.subr.mxu0 0.0
      %1326 = vmatpush1.msra.mxu0 0.0
      %1327 = vmatprep.subr.mxu0 0.0
      %1328 = vmatpush1.msra.mxu0 0.0
      %1329 = vmatprep.subr.mxu0 0.0
      %1330 = vmatpush1.msra.mxu0 0.0
      %1331 = vmatprep.subr.mxu0 0.0
      %1332 = vmatpush1.msra.mxu0 0.0
      %1333 = vmatprep.subr.mxu0 0.0
      %1334 = vmatpush1.msra.mxu0 0.0
      %1335 = vmatprep.subr.mxu0 0.0
      %1336 = vmatpush1.msra.mxu0 0.0
      %1337 = vmatprep.subr.mxu0 0.0
      %1338 = vmatpush1.msra.mxu0 0.0
      %1339 = vmatprep.subr.mxu0 0.0
      %1340 = vmatpush1.msra.mxu0 0.0
      %1341 = vmatprep.subr.mxu0 0.0
      %1342 = vmatpush1.msra.mxu0 0.0
      %1343 = vmatprep.subr.mxu0 0.0
      %1344 = vmatpush1.msra.mxu0 0.0
      %1345 = vmatprep.subr.mxu0 0.0
      %1346 = vmatpush1.msra.mxu0 0.0
      %1347 = vmatprep.subr.mxu0 0.0
      %1348 = vmatpush1.msra.mxu0 0.0
      %1349 = vmatprep.subr.mxu0 0.0
      %1350 = vmatpush1.msra.mxu0 0.0
      %1351 = vmatprep.subr.mxu0 0.0
      %1352 = vmatpush1.msra.mxu0 0.0
      %1353 = vmatprep.subr.mxu0 0.0
      %1354 = vmatpush1.msra.mxu0 0.0
      %1355 = vmatprep.subr.mxu0 0.0
      %1356 = vmatpush1.msra.mxu0 0.0
      %1357 = vmatprep.subr.mxu0 0.0
      %1358 = vmatpush1.msra.mxu0 0.0
      %1359 = vmatprep.subr.mxu0 0.0
      %1360 = vmatpush1.msra.mxu0 0.0
      %1361 = vmatprep.subr.mxu0 0.0
      %1362 = vmatpush1.msra.mxu0 0.0
      %1363 = vmatprep.subr.mxu0 0.0
      %1364 = vmatpush1.msra.mxu0 0.0
      %1365 = vmatprep.subr.mxu0 0.0
      %1366 = vmatpush1.msra.mxu0 0.0
      %1367 = vmatprep.subr.mxu0 0.0
      %1368 = vmatpush1.msra.mxu0 0.0
      %1369 = vmatprep.subr.mxu0 0.0
      %1370 = vmatpush1.msra.mxu0 0.0
      %1371 = vmatprep.subr.mxu0 0.0
      %1372 = vmatpush1.msra.mxu0 0.0
      %1373 = vmatprep.subr.mxu0 0.0
      %1374 = vmatpush1.msra.mxu0 0.0
      %1375 = vmatprep.subr.mxu0 0.0
      %1376 = vmatpush1.msra.mxu0 0.0
      %1377 = vmatprep.mubr.f32.mxu0 0.0
      %1378 = vmatmul.mubr.f32.gmra.mrb[0].mxu0 %v1311
      %v1379 = vpop.f32.mrb[0].mxu0
      %v1380 = vadd.f32 0.0, %v1379
      %v1381 = vpop.f32.mrb[0].mxu0
      %1382 = vdwg.mxu0
      %v1383 = vadd.f32 %v1307, %v1380
      %v1384 = vxor.u32 %v1383, 2147483648
      %v1385 = vmul.f32 %v1384, 1.442695
      %v1386 = vpow.pop %v1385
      %v1387 = vadd.f32 %v1386, 1.0
      %v1388 = vrcp.pop %v1387
      %v1389 = vmul.f32 1.0, %v1388
      %v1390 = vtanh.pop %v1383
      %v1391 = vmul.f32 %v1389, %v1300
      %1393 = vrot.lane.b32.xlu0 %v1390, 32
      %v1394 = vpop.permute.xlu0 %1393
      %v1396 = vmul.f32 %v1389, %v1394
      %1398 = vrot.lane.b32.xlu0 %v1396, 32
      %v1399 = vpop.permute.xlu0 %1398
      %v1401 = vadd.f32 %v1391, %v1399
      %v1402 = vtanh.pop %v1401
      %1404 = vrot.lane.b32.xlu0 %v1402, 32
      %v1405 = vpop.permute.xlu0 %1404
      %v1407 = vmul.f32 %v1389, %v1405
      %1409 = vrot.lane.b32.xlu0 %v1407, 64
      %v1410 = vpop.permute.xlu0 %1409
      %1412 = vst.msk [vmem:[#allocation6] sm:$0xff] %vm451, %v1410
      %1414 = vrot.lane.b32.xlu0 %v1401, 96
      %v1415 = vpop.permute.xlu0 %1414
      %1417 = vst.msk [vmem:[#allocation7] sm:$0xff] %vm451, %v1415
      %p1418 = scmp.eq.s32.totalorder %s20, 1
      // Predicated region
      $region61: #{lstm_model_forward.1} parent=55 // pred_check
        %p1419 = pneg %p1418
      $region62: #{lstm_model_forward.1} parent=55 // pred_check_branch
        %1421 = sbr.rel (%p1419) target = $region64
      $region63: #{lstm_model_forward.1} parent=55 // pred_region
        %v1422 = vld [vmem:[%s7] sm:$0xff]
        %v1423 = vld [vmem:[%s7 + $0x8] sm:$0xff]
        %v1424 = vld [vmem:[%s7 + $0x10] sm:$0xff]
        %v1425 = vld [vmem:[%s7 + $0x18] sm:$0xff]
        %v1426 = vld [vmem:[%s8] sm:$0x1]
        %v1428 = vlaneseq
        %v1429 = vshrl.u32 %v1428, 7
        %v1430 = vsub.s32 0, %v1429
        %v1431 = vrot.slane %v1426, %v1430
        %v1433 = vsel %vm451, %v1410, 0
        %1435 = vmatprep.subr.mxu0 0.0
        %1436 = vmatpush1.msra.mxu0 %v1422
        %1437 = vmatprep.subr.mxu0 0.0
        %1438 = vmatpush1.msra.mxu0 %v1423
        %1439 = vmatprep.subr.mxu0 0.0
        %1440 = vmatpush1.msra.mxu0 %v1424
        %1441 = vmatprep.subr.mxu0 0.0
        %1442 = vmatpush1.msra.mxu0 %v1425
        %1443 = vmatprep.subr.mxu0 0.0
        %1444 = vmatpush1.msra.mxu0 0.0
        %1445 = vmatprep.subr.mxu0 0.0
        %1446 = vmatpush1.msra.mxu0 0.0
        %1447 = vmatprep.subr.mxu0 0.0
        %1448 = vmatpush1.msra.mxu0 0.0
        %1449 = vmatprep.subr.mxu0 0.0
        %1450 = vmatpush1.msra.mxu0 0.0
        %1451 = vmatprep.subr.mxu0 0.0
        %1452 = vmatpush1.msra.mxu0 0.0
        %1453 = vmatprep.subr.mxu0 0.0
        %1454 = vmatpush1.msra.mxu0 0.0
        %1455 = vmatprep.subr.mxu0 0.0
        %1456 = vmatpush1.msra.mxu0 0.0
        %1457 = vmatprep.subr.mxu0 0.0
        %1458 = vmatpush1.msra.mxu0 0.0
        %1459 = vmatprep.subr.mxu0 0.0
        %1460 = vmatpush1.msra.mxu0 0.0
        %1461 = vmatprep.subr.mxu0 0.0
        %1462 = vmatpush1.msra.mxu0 0.0
        %1463 = vmatprep.subr.mxu0 0.0
        %1464 = vmatpush1.msra.mxu0 0.0
        %1465 = vmatprep.subr.mxu0 0.0
        %1466 = vmatpush1.msra.mxu0 0.0
        %1467 = vmatprep.subr.mxu0 0.0
        %1468 = vmatpush1.msra.mxu0 0.0
        %1469 = vmatprep.subr.mxu0 0.0
        %1470 = vmatpush1.msra.mxu0 0.0
        %1471 = vmatprep.subr.mxu0 0.0
        %1472 = vmatpush1.msra.mxu0 0.0
        %1473 = vmatprep.subr.mxu0 0.0
        %1474 = vmatpush1.msra.mxu0 0.0
        %1475 = vmatprep.subr.mxu0 0.0
        %1476 = vmatpush1.msra.mxu0 0.0
        %1477 = vmatprep.subr.mxu0 0.0
        %1478 = vmatpush1.msra.mxu0 0.0
        %1479 = vmatprep.subr.mxu0 0.0
        %1480 = vmatpush1.msra.mxu0 0.0
        %1481 = vmatprep.subr.mxu0 0.0
        %1482 = vmatpush1.msra.mxu0 0.0
        %1483 = vmatprep.subr.mxu0 0.0
        %1484 = vmatpush1.msra.mxu0 0.0
        %1485 = vmatprep.subr.mxu0 0.0
        %1486 = vmatpush1.msra.mxu0 0.0
        %1487 = vmatprep.subr.mxu0 0.0
        %1488 = vmatpush1.msra.mxu0 0.0
        %1489 = vmatprep.subr.mxu0 0.0
        %1490 = vmatpush1.msra.mxu0 0.0
        %1491 = vmatprep.subr.mxu0 0.0
        %1492 = vmatpush1.msra.mxu0 0.0
        %1493 = vmatprep.subr.mxu0 0.0
        %1494 = vmatpush1.msra.mxu0 0.0
        %1495 = vmatprep.subr.mxu0 0.0
        %1496 = vmatpush1.msra.mxu0 0.0
        %1497 = vmatprep.subr.mxu0 0.0
        %1498 = vmatpush1.msra.mxu0 0.0
        %1499 = vmatprep.mubr.f32.mxu0 0.0
        %1500 = vmatmul.mubr.f32.gmra.mrb[0].mxu0 %v1433
        %v1501 = vpop.f32.mrb[0].mxu0
        %v1502 = vadd.f32 %v1431, %v1501
        %v1503 = vpop.f32.mrb[0].mxu0
        %1504 = vdwg.mxu0
        %vm1505 = vcmask 64512
        %1506 = vst.msk [vmem:[%s9] sm:$0xff] %vm1505, %v1502
      $region64: #{lstm_model_forward.1} parent=55 // pred_fallthru
        _
      // Predicated region
      $region65: #{lstm_model_forward.1} parent=55 // pred_check
        %p1507 = pneg %p227
      $region66: #{lstm_model_forward.1} parent=55 // pred_check_branch
        %1509 = sbr.rel (%p1507) target = $region68
      $region67: #{lstm_model_forward.1} parent=55 // pred_region
        _
      $region68: #{lstm_model_forward.1} parent=55 // pred_fallthru
        _
      // Predicated region
      $region69: #{lstm_model_forward.1} parent=55 // pred_check
        %p1510 = pneg %p227
      $region70: #{lstm_model_forward.1} parent=55 // pred_check_branch
        %1512 = sbr.rel (%p1510) target = $region72
      $region71: #{lstm_model_forward.1} parent=55 // pred_region
        _
      $region72: #{lstm_model_forward.1} parent=55 // pred_fallthru
        _
    $region56: #{lstm_model_forward.1} parent=5 // pred_fallthru
      _
    %p1513 = scmp.le.s32.totalorder 2, %s15
    // Predicated region
    $region73: #{lstm_model_forward.1} parent=5 // pred_check
      %p1514 = pneg %p1513
    $region74: #{lstm_model_forward.1} parent=5 // pred_check_branch
      %1516 = sbr.rel (%p1514) target = $region76
    $region75: #{lstm_model_forward.1} parent=5 // pred_region
      %s1517 = ssub.s32 %s15, 2
    $region76: #{lstm_model_forward.1} parent=5 // pred_fallthru
      _
  $region6: #{lstm_model_forward.1} parent=0 // loop_footer
    %s19 = sadd.s32 1, %s15
  $region7: #{lstm_model_forward.1} parent=0 // loop_footer_branch
    %14 = sbr.rel target = $region3
  $region8: #{lstm_model_forward.1} parent=0 // loop_exit
    _

</llo_original>
